<compile_context>
chip_gen: v6e
topology: v6e:2x2x1
jax: 0.10.0
libtpu: 0.0.40
codegen_flags: <defaults>
</compile_context>

<pallas_src>
import jax
import jax.numpy as jnp
from jax.experimental import pallas as pl
from jax.experimental.pallas import tpu as pltpu

_MASK_VAL = -1e30


# ----------------------------------------------------------------------------
# One GATConv layer on values already resident in VMEM / registers.
# ----------------------------------------------------------------------------
def _gat_layer(h, adj_bias, w, a_rl, res_w, bias, *,
               heads, out_feats, agg_mode, apply_elu, neg_slope):
    f = out_feats
    h_bf = h.astype(jnp.bfloat16)

    # Feature projection (bf16 MXU, f32 accumulate). Weights arrive pre-cast bf16.
    z = jnp.dot(h_bf, w, preferred_element_type=jnp.float32)            # (N, H*F)
    z_bf = z.astype(jnp.bfloat16)

    # Residual: identity when in_feats == H*F, linear projection otherwise.
    if res_w is None:
        res = h
    else:
        res = jnp.dot(h_bf, res_w, preferred_element_type=jnp.float32)  # (N, H*F)

    # All-head attention logits from ONE MXU pass:
    #   erl = z @ [a_r | a_l]  -> (N, 2H)
    #   er  = erl[:, :H]       (dst terms,  <z[i, hF:(h+1)F], attn_r[h]>)
    #   el_t = erl[:, H:].T    (src terms,  tiny (N,H)->(H,N) XLU transpose)
    # This replaces the old dot_general that forced a transpose of the full
    # (N, H*F) z operand.
    erl = jnp.dot(z_bf, a_rl, preferred_element_type=jnp.float32)       # (N, 2H)
    er = erl[:, :heads]
    el_t = jnp.transpose(erl[:, heads:])                                # (H, N)

    head_outs = []
    for hd in range(heads):                                             # static unroll
        e = er[:, hd:hd + 1] + el_t[hd:hd + 1, :]                       # e[i,j]=er[i]+el[j]
        e = jnp.where(e >= 0.0, e, neg_slope * e)                       # LeakyReLU
        e = e + adj_bias                                                # additive mask
        m = jnp.max(e, axis=1, keepdims=True)
        p = jnp.exp(e - m)                                              # masked -> exact 0
        denom = jnp.maximum(jnp.sum(p, axis=1, keepdims=True), 1e-20)   # guard vs inf
        alpha = p * pl.reciprocal(denom, approx=True)                   # EUP recip
        zh = z_bf[:, hd * f:(hd + 1) * f]
        head_outs.append(jnp.dot(alpha.astype(jnp.bfloat16), zh,
                                 preferred_element_type=jnp.float32))   # (N, F)

    if agg_mode == 'flatten':
        # One lane-dense (N, H*F) slab; residual + bias applied once, full width.
        out = jnp.concatenate(head_outs, axis=1) + res + bias
    else:
        # mean over heads, residual + bias folded into the mean.
        acc = head_outs[0]
        for r in head_outs[1:]:
            acc = acc + r
        res_acc = res[:, 0:f]
        bias_acc = bias[:, 0:f]
        for hd in range(1, heads):
            res_acc = res_acc + res[:, hd * f:(hd + 1) * f]
            bias_acc = bias_acc + bias[:, hd * f:(hd + 1) * f]
        out = (acc + res_acc + bias_acc) * (1.0 / heads)

    if apply_elu:
        out = jnp.where(out > 0.0, out, jnp.exp(out) - 1.0)
    return out


# ----------------------------------------------------------------------------
# Fused kernel: all GAT layers + WeightedSumAndMax readout in one pallas_call.
# ----------------------------------------------------------------------------
def _make_fused_kernel(layer_cfgs, num_graphs, neg_slope=0.2):
    def kernel(*refs):
        it = iter(refs)
        feats_ref = next(it)
        adj_bias_ref = next(it)
        member_ref = next(it)
        layer_params = []
        for cfg in layer_cfgs:
            w_ref = next(it)
            a_rl_ref = next(it)
            res_w_ref = None if cfg['identity_res'] else next(it)
            bias_ref = next(it)
            layer_params.append((w_ref, a_rl_ref, res_w_ref, bias_ref))
        ws_w_ref = next(it)
        ws_b_ref = next(it)
        out_ref = next(it)

        # Cast the bf16 additive mask to f32 ONCE; shared by all heads & layers.
        adj_bias = adj_bias_ref[...].astype(jnp.float32)                 # (N, N)

        h = feats_ref[...]
        for cfg, (w_ref, a_rl_ref, res_w_ref, bias_ref) in zip(
                layer_cfgs, layer_params):
            h = _gat_layer(h, adj_bias, w_ref[...], a_rl_ref[...],
                           None if res_w_ref is None else res_w_ref[...],
                           bias_ref[...],
                           heads=cfg['heads'], out_feats=cfg['out'],
                           agg_mode=cfg['agg'], apply_elu=cfg['elu'],
                           neg_slope=neg_slope)

        # --- WeightedSumAndMax readout ---
        member = member_ref[...]                                         # (N, G)
        # Gate via VPU multiply-reduce (a D x 1 matmul wastes an MXU pass).
        logits = jnp.sum(h * ws_w_ref[...], axis=1, keepdims=True) + ws_b_ref[...]
        gate = jax.nn.sigmoid(logits)
        weighted = (h * gate).astype(jnp.bfloat16)
        h_sum = jax.lax.dot_general(member.astype(jnp.bfloat16), weighted,
                                    (((0,), (0,)), ((), ())),
                                    preferred_element_type=jnp.float32)  # (G, D)
        # TODO(synk): for batched inference with G in the tens/hundreds, replace
        # this O(G*N*D) masked-max loop with scalar-prefetched per-graph row
        # offsets (nodes are contiguous per graph in a DGL batch) and a pl.ds
        # segment max — O(N*D) total.
        maxes = []
        for g in range(num_graphs):                                      # static unroll
            mg = member[:, g:g + 1] > 0
            maxes.append(jnp.max(jnp.where(mg, h, _MASK_VAL), axis=0, keepdims=True))
        h_max = jnp.concatenate(maxes, axis=0)                           # (G, D)
        out_ref[...] = jnp.concatenate([h_sum, h_max], axis=1)           # single wide store
    return kernel


# ----------------------------------------------------------------------------
# Wrappers
# ----------------------------------------------------------------------------
def _full_spec(x):
    nd = x.ndim
    return pl.BlockSpec(x.shape, lambda i, _nd=nd: (0,) * _nd)


def _build_attn_mat(attn_l, attn_r):
    """Block-structured projection so ALL heads' er/el logits come from a single
    matmul:  z @ [a_r | a_l]  -> (N, 2H).  a_rl has shape (H*F, 2H)."""
    heads, f = attn_l.shape
    a_rl = jnp.zeros((heads * f, 2 * heads), dtype=jnp.float32)
    for h in range(heads):
        a_rl = a_rl.at[h * f:(h + 1) * f, h].set(attn_r[h])           # er (dst) half
        a_rl = a_rl.at[h * f:(h + 1) * f, heads + h].set(attn_l[h])   # el (src) half
    return a_rl


def gat_predictor(feats, adj, member, params, layer_cfg):
    num_graphs = member.shape[1]
    # adj is the only O(N^2) input: ship it as a bf16 ADDITIVE mask (0 / -1e30)
    # so the kernel needs zero per-head select ops and half the HBM bytes.
    adj_bias = jnp.where(adj > 0, 0.0, _MASK_VAL).astype(jnp.bfloat16)
    args = [feats, adj_bias, member]
    cfgs = []
    for cfg, p in zip(layer_cfg, params['layers']):
        identity_res = p.get('res_W') is None
        a_rl = _build_attn_mat(p['attn_l'], p['attn_r']).astype(jnp.bfloat16)
        args += [p['W'].astype(jnp.bfloat16), a_rl]
        if not identity_res:
            args.append(p['res_W'].astype(jnp.bfloat16))
        args.append(p['bias'])
        cfgs.append(dict(heads=cfg['heads'], out=cfg['out'], agg=cfg['agg'],
                         elu=cfg['elu'], identity_res=identity_res))
    last = layer_cfg[-1]
    d = last['heads'] * last['out'] if last['agg'] == 'flatten' else last['out']
    args += [params['ws_W'].reshape(1, -1), params['ws_b']]

    kernel = _make_fused_kernel(cfgs, num_graphs)
    # TODO(synk): at large N the single fused block must be restructured, not just
    # row-tiled: layer-1 attention for any dst row needs ALL rows of the layer-0
    # output, so either (a) split into one pallas_call per GAT layer with the
    # bf16 (N,H*F) intermediate in HBM, or (b) add an outer "arbitrary" layer
    # grid axis holding the full intermediate in VMEM scratch while adj is tiled
    # as (TILE_N, N) "parallel" row blocks (also engages both v7x TensorCores
    # and respects its 64 MiB VMEM).  Sparse molecular graphs additionally want
    # block-sparse adj tiles skipped via scalar-prefetch + pl.when.
    return pl.pallas_call(
        kernel,
        out_shape=jax.ShapeDtypeStruct((num_graphs, 2 * d), jnp.float32),
        grid=(1,),
        in_specs=[_full_spec(a) for a in args],
        out_specs=pl.BlockSpec((num_graphs, 2 * d), lambda i: (0, 0)),
        compiler_params=pltpu.CompilerParams(
            dimension_semantics=("arbitrary",),
            # Explicit scoped-VMEM budget (v5e defaults to 16 MiB); safe on all
            # generations at this size, re-derive alongside the adj tiling above.
            vmem_limit_bytes=32 * 1024 * 1024),
    )(*args)


if __name__ == "__main__":
    # Small deterministic config: 2 graphs of 8 nodes each, in_feats=32,
    # hidden_dim=[16, 16], num_heads=[4, 4], agg_modes=['flatten', 'mean'],
    # activations=[elu, None]  ->  gnn_out_feats = 16, readout out = (2, 32).
    N, G = 16, 2
    IN_FEATS = 32
    HIDDEN = [16, 16]
    HEADS = [4, 4]
    layer_cfg = [
        dict(out=HIDDEN[0], heads=HEADS[0], agg='flatten', elu=True),
        dict(out=HIDDEN[1], heads=HEADS[1], agg='mean', elu=False),
    ]

    # Deterministic graph: two disjoint bidirectional rings + self loops
    # (self loops guarantee non-zero in-degree, matching DGL's
    # allow_zero_in_degree=False contract assumed by the additive mask).
    adj_py = [[0.0] * N for _ in range(N)]
    member_py = [[0.0] * G for _ in range(N)]
    for g in range(G):
        base = g * 8
        for k in range(8):
            i = base + k
            j = base + (k + 1) % 8
            adj_py[i][i] = 1.0          # self loop
            adj_py[j][i] = 1.0          # edge i -> j
            adj_py[i][j] = 1.0          # edge j -> i
            member_py[i][g] = 1.0
    adj = jnp.array(adj_py, dtype=jnp.float32)
    member = jnp.array(member_py, dtype=jnp.float32)

    key = jax.random.PRNGKey(0)
    keys = jax.random.split(key, 16)

    def nrm(k, shape, scale=0.1):
        return scale * jax.random.normal(k, shape, dtype=jnp.float32)

    feats = jax.random.normal(keys[0], (N, IN_FEATS), dtype=jnp.float32)

    # Layer 0: in 32 -> 4 heads x 16 (flatten -> 64). in != heads*out => linear residual.
    l0 = dict(
        W=nrm(keys[1], (IN_FEATS, HEADS[0] * HIDDEN[0])),
        attn_l=nrm(keys[2], (HEADS[0], HIDDEN[0])),
        attn_r=nrm(keys[3], (HEADS[0], HIDDEN[0])),
        res_W=nrm(keys[4], (IN_FEATS, HEADS[0] * HIDDEN[0])),
        bias=nrm(keys[5], (1, HEADS[0] * HIDDEN[0])),
    )
    # Layer 1: in 64 -> 4 heads x 16 (mean -> 16). in == heads*out => identity residual.
    in1 = HEADS[0] * HIDDEN[0]
    l1 = dict(
        W=nrm(keys[6], (in1, HEADS[1] * HIDDEN[1])),
        attn_l=nrm(keys[7], (HEADS[1], HIDDEN[1])),
        attn_r=nrm(keys[8], (HEADS[1], HIDDEN[1])),
        res_W=None,                      # identity residual handled statically
        bias=nrm(keys[9], (1, HEADS[1] * HIDDEN[1])),
    )
    params = dict(
        layers=[l0, l1],
        ws_W=nrm(keys[10], (HIDDEN[1], 1)),
        ws_b=nrm(keys[11], (1, 1)),
    )

    out = gat_predictor(feats, adj, member, params, layer_cfg)
    jax.block_until_ready(out)
    assert out.shape == (G, 2 * HIDDEN[1]), out.shape
    # TODO(synk): feat_drop / attn_drop are train-time dropout; inference path is identity.
    print("KERNEL_OK")
</pallas_src>

<mosaic_0001>
module attributes {stable_mosaic.version = 11 : i64} {
  func.func @kernel(%arg0: i32, %arg1: memref<16x32xf32, #tpu.memory_space<vmem>>, %arg2: memref<16x16xbf16, #tpu.memory_space<vmem>>, %arg3: memref<16x2xf32, #tpu.memory_space<vmem>>, %arg4: memref<32x64xbf16, #tpu.memory_space<vmem>>, %arg5: memref<64x8xbf16, #tpu.memory_space<vmem>>, %arg6: memref<32x64xbf16, #tpu.memory_space<vmem>>, %arg7: memref<1x64xf32, #tpu.memory_space<vmem>>, %arg8: memref<64x64xbf16, #tpu.memory_space<vmem>>, %arg9: memref<64x8xbf16, #tpu.memory_space<vmem>>, %arg10: memref<1x64xf32, #tpu.memory_space<vmem>>, %arg11: memref<1x16xf32, #tpu.memory_space<vmem>>, %arg12: memref<1x1xf32, #tpu.memory_space<vmem>>, %arg13: memref<2x32xf32, #tpu.memory_space<vmem>>) attributes {dimension_semantics = [#tpu.dimension_semantics<arbitrary>], iteration_bounds = array<i64: 1>, scalar_prefetch = 0 : i64, scratch_operands = 0 : i64, tpu.core_type = #tpu.core_type<tc>, window_params = [{pipeline_mode = #tpu.pipeline_mode<synchronous>, transform_indices = @transform_0, window_bounds = array<i64: 16, 32>}, {pipeline_mode = #tpu.pipeline_mode<synchronous>, transform_indices = @transform_1, window_bounds = array<i64: 16, 16>}, {pipeline_mode = #tpu.pipeline_mode<synchronous>, transform_indices = @transform_2, window_bounds = array<i64: 16, 2>}, {pipeline_mode = #tpu.pipeline_mode<synchronous>, transform_indices = @transform_3, window_bounds = array<i64: 32, 64>}, {pipeline_mode = #tpu.pipeline_mode<synchronous>, transform_indices = @transform_4, window_bounds = array<i64: 64, 8>}, {pipeline_mode = #tpu.pipeline_mode<synchronous>, transform_indices = @transform_5, window_bounds = array<i64: 32, 64>}, {pipeline_mode = #tpu.pipeline_mode<synchronous>, transform_indices = @transform_6, window_bounds = array<i64: 1, 64>}, {pipeline_mode = #tpu.pipeline_mode<synchronous>, transform_indices = @transform_7, window_bounds = array<i64: 64, 64>}, {pipeline_mode = #tpu.pipeline_mode<synchronous>, transform_indices = @transform_8, window_bounds = array<i64: 64, 8>}, {pipeline_mode = #tpu.pipeline_mode<synchronous>, transform_indices = @transform_9, window_bounds = array<i64: 1, 64>}, {pipeline_mode = #tpu.pipeline_mode<synchronous>, transform_indices = @transform_10, window_bounds = array<i64: 1, 16>}, {pipeline_mode = #tpu.pipeline_mode<synchronous>, transform_indices = @transform_11, window_bounds = array<i64: 1, 1>}, {pipeline_mode = #tpu.pipeline_mode<synchronous>, transform_indices = @transform_12, window_bounds = array<i64: 2, 32>}]} {
    %c0 = arith.constant 0 : index
    %c0_0 = arith.constant 0 : index
    %0 = vector.load %arg2[%c0, %c0_0] : memref<16x16xbf16, #tpu.memory_space<vmem>>, vector<16x16xbf16>
    %1 = arith.extf %0 : vector<16x16xbf16> to vector<16x16xf32>
    %c0_1 = arith.constant 0 : index
    %c0_2 = arith.constant 0 : index
    %2 = vector.load %arg1[%c0_1, %c0_2] : memref<16x32xf32, #tpu.memory_space<vmem>>, vector<16x32xf32>
    %c0_3 = arith.constant 0 : index
    %c0_4 = arith.constant 0 : index
    %3 = vector.load %arg4[%c0_3, %c0_4] : memref<32x64xbf16, #tpu.memory_space<vmem>>, vector<32x64xbf16>
    %c0_5 = arith.constant 0 : index
    %c0_6 = arith.constant 0 : index
    %4 = vector.load %arg5[%c0_5, %c0_6] : memref<64x8xbf16, #tpu.memory_space<vmem>>, vector<64x8xbf16>
    %c0_7 = arith.constant 0 : index
    %c0_8 = arith.constant 0 : index
    %5 = vector.load %arg6[%c0_7, %c0_8] : memref<32x64xbf16, #tpu.memory_space<vmem>>, vector<32x64xbf16>
    %c0_9 = arith.constant 0 : index
    %c0_10 = arith.constant 0 : index
    %6 = vector.load %arg7[%c0_9, %c0_10] : memref<1x64xf32, #tpu.memory_space<vmem>>, vector<1x64xf32>
    %7 = arith.truncf %2 : vector<16x32xf32> to vector<16x32xbf16>
    %cst = arith.constant dense<0.000000e+00> : vector<16x64xf32>
    %8 = tpu.matmul %7, %3, %cst {dimension_numbers = #tpu.dot_dimension_numbers<[1], [0], [0], [1], [0, 0, 1, 1], [], []>} : vector<16x32xbf16>, vector<32x64xbf16>, vector<16x64xf32> -> vector<16x64xf32>
    %9 = arith.truncf %8 : vector<16x64xf32> to vector<16x64xbf16>
    %cst_11 = arith.constant dense<0.000000e+00> : vector<16x64xf32>
    %10 = tpu.matmul %7, %5, %cst_11 {dimension_numbers = #tpu.dot_dimension_numbers<[1], [0], [0], [1], [0, 0, 1, 1], [], []>} : vector<16x32xbf16>, vector<32x64xbf16>, vector<16x64xf32> -> vector<16x64xf32>
    %cst_12 = arith.constant dense<0.000000e+00> : vector<16x8xf32>
    %11 = tpu.matmul %9, %4, %cst_12 {dimension_numbers = #tpu.dot_dimension_numbers<[1], [0], [0], [1], [0, 0, 1, 1], [], []>} : vector<16x64xbf16>, vector<64x8xbf16>, vector<16x8xf32> -> vector<16x8xf32>
    %12 = vector.extract_strided_slice %11 {offsets = [0, 0], sizes = [16, 4], strides = [1, 1]} : vector<16x8xf32> to vector<16x4xf32>
    %13 = vector.extract_strided_slice %11 {offsets = [0, 4], sizes = [16, 4], strides = [1, 1]} : vector<16x8xf32> to vector<16x4xf32>
    %14 = tpu.transpose %13, [1, 0] : vector<16x4xf32> -> vector<4x16xf32>
    %15 = vector.extract_strided_slice %12 {offsets = [0, 0], sizes = [16, 1], strides = [1, 1]} : vector<16x4xf32> to vector<16x1xf32>
    %16 = vector.extract_strided_slice %14 {offsets = [0, 0], sizes = [1, 16], strides = [1, 1]} : vector<4x16xf32> to vector<1x16xf32>
    %17 = vector.broadcast %15 : vector<16x1xf32> to vector<16x16xf32>
    %18 = vector.broadcast %16 : vector<1x16xf32> to vector<16x16xf32>
    %19 = arith.addf %17, %18 : vector<16x16xf32>
    %cst_13 = arith.constant 0.000000e+00 : f32
    %20 = vector.broadcast %cst_13 : f32 to vector<16x16xf32>
    %21 = arith.cmpf oge, %19, %20 : vector<16x16xf32>
    %cst_14 = arith.constant 2.000000e-01 : f32
    %22 = vector.broadcast %cst_14 : f32 to vector<16x16xf32>
    %23 = arith.mulf %22, %19 : vector<16x16xf32>
    %24 = arith.select %21, %19, %23 : vector<16x16xi1>, vector<16x16xf32>
    %25 = arith.addf %24, %1 : vector<16x16xf32>
    %cst_15 = arith.constant dense<0xFF800000> : vector<16xf32>
    %26 = vector.multi_reduction <maximumf>, %25, %cst_15 [1] : vector<16x16xf32> to vector<16xf32>
    %27 = vector.shape_cast %26 : vector<16xf32> to vector<16x1xf32>
    %28 = vector.broadcast %27 : vector<16x1xf32> to vector<16x16xf32>
    %29 = arith.subf %25, %28 : vector<16x16xf32>
    %30 = math.exp %29 : vector<16x16xf32>
    %cst_16 = arith.constant dense<0.000000e+00> : vector<16xf32>
    %31 = vector.multi_reduction <add>, %30, %cst_16 [1] : vector<16x16xf32> to vector<16xf32>
    %32 = vector.shape_cast %31 : vector<16xf32> to vector<16x1xf32>
    %cst_17 = arith.constant 9.99999968E-21 : f32
    %33 = vector.broadcast %cst_17 : f32 to vector<16x1xf32>
    %34 = arith.maximumf %32, %33 : vector<16x1xf32>
    %35 = tpu.reciprocal %34 {approx = true} : vector<16x1xf32> -> vector<16x1xf32>
    %36 = vector.broadcast %35 : vector<16x1xf32> to vector<16x16xf32>
    %37 = arith.mulf %30, %36 : vector<16x16xf32>
    %38 = vector.extract_strided_slice %9 {offsets = [0, 0], sizes = [16, 16], strides = [1, 1]} : vector<16x64xbf16> to vector<16x16xbf16>
    %39 = arith.truncf %37 : vector<16x16xf32> to vector<16x16xbf16>
    %cst_18 = arith.constant dense<0.000000e+00> : vector<16x16xf32>
    %40 = tpu.matmul %39, %38, %cst_18 {dimension_numbers = #tpu.dot_dimension_numbers<[1], [0], [0], [1], [0, 0, 1, 1], [], []>} : vector<16x16xbf16>, vector<16x16xbf16>, vector<16x16xf32> -> vector<16x16xf32>
    %41 = vector.extract_strided_slice %12 {offsets = [0, 1], sizes = [16, 1], strides = [1, 1]} : vector<16x4xf32> to vector<16x1xf32>
    %42 = vector.extract_strided_slice %14 {offsets = [1, 0], sizes = [1, 16], strides = [1, 1]} : vector<4x16xf32> to vector<1x16xf32>
    %43 = vector.broadcast %41 : vector<16x1xf32> to vector<16x16xf32>
    %44 = vector.broadcast %42 : vector<1x16xf32> to vector<16x16xf32>
    %45 = arith.addf %43, %44 : vector<16x16xf32>
    %cst_19 = arith.constant 0.000000e+00 : f32
    %46 = vector.broadcast %cst_19 : f32 to vector<16x16xf32>
    %47 = arith.cmpf oge, %45, %46 : vector<16x16xf32>
    %cst_20 = arith.constant 2.000000e-01 : f32
    %48 = vector.broadcast %cst_20 : f32 to vector<16x16xf32>
    %49 = arith.mulf %48, %45 : vector<16x16xf32>
    %50 = arith.select %47, %45, %49 : vector<16x16xi1>, vector<16x16xf32>
    %51 = arith.addf %50, %1 : vector<16x16xf32>
    %cst_21 = arith.constant dense<0xFF800000> : vector<16xf32>
    %52 = vector.multi_reduction <maximumf>, %51, %cst_21 [1] : vector<16x16xf32> to vector<16xf32>
    %53 = vector.shape_cast %52 : vector<16xf32> to vector<16x1xf32>
    %54 = vector.broadcast %53 : vector<16x1xf32> to vector<16x16xf32>
    %55 = arith.subf %51, %54 : vector<16x16xf32>
    %56 = math.exp %55 : vector<16x16xf32>
    %cst_22 = arith.constant dense<0.000000e+00> : vector<16xf32>
    %57 = vector.multi_reduction <add>, %56, %cst_22 [1] : vector<16x16xf32> to vector<16xf32>
    %58 = vector.shape_cast %57 : vector<16xf32> to vector<16x1xf32>
    %cst_23 = arith.constant 9.99999968E-21 : f32
    %59 = vector.broadcast %cst_23 : f32 to vector<16x1xf32>
    %60 = arith.maximumf %58, %59 : vector<16x1xf32>
    %61 = tpu.reciprocal %60 {approx = true} : vector<16x1xf32> -> vector<16x1xf32>
    %62 = vector.broadcast %61 : vector<16x1xf32> to vector<16x16xf32>
    %63 = arith.mulf %56, %62 : vector<16x16xf32>
    %64 = vector.extract_strided_slice %9 {offsets = [0, 16], sizes = [16, 16], strides = [1, 1]} : vector<16x64xbf16> to vector<16x16xbf16>
    %65 = arith.truncf %63 : vector<16x16xf32> to vector<16x16xbf16>
    %cst_24 = arith.constant dense<0.000000e+00> : vector<16x16xf32>
    %66 = tpu.matmul %65, %64, %cst_24 {dimension_numbers = #tpu.dot_dimension_numbers<[1], [0], [0], [1], [0, 0, 1, 1], [], []>} : vector<16x16xbf16>, vector<16x16xbf16>, vector<16x16xf32> -> vector<16x16xf32>
    %67 = vector.extract_strided_slice %12 {offsets = [0, 2], sizes = [16, 1], strides = [1, 1]} : vector<16x4xf32> to vector<16x1xf32>
    %68 = vector.extract_strided_slice %14 {offsets = [2, 0], sizes = [1, 16], strides = [1, 1]} : vector<4x16xf32> to vector<1x16xf32>
    %69 = vector.broadcast %67 : vector<16x1xf32> to vector<16x16xf32>
    %70 = vector.broadcast %68 : vector<1x16xf32> to vector<16x16xf32>
    %71 = arith.addf %69, %70 : vector<16x16xf32>
    %cst_25 = arith.constant 0.000000e+00 : f32
    %72 = vector.broadcast %cst_25 : f32 to vector<16x16xf32>
    %73 = arith.cmpf oge, %71, %72 : vector<16x16xf32>
    %cst_26 = arith.constant 2.000000e-01 : f32
    %74 = vector.broadcast %cst_26 : f32 to vector<16x16xf32>
    %75 = arith.mulf %74, %71 : vector<16x16xf32>
    %76 = arith.select %73, %71, %75 : vector<16x16xi1>, vector<16x16xf32>
    %77 = arith.addf %76, %1 : vector<16x16xf32>
    %cst_27 = arith.constant dense<0xFF800000> : vector<16xf32>
    %78 = vector.multi_reduction <maximumf>, %77, %cst_27 [1] : vector<16x16xf32> to vector<16xf32>
    %79 = vector.shape_cast %78 : vector<16xf32> to vector<16x1xf32>
    %80 = vector.broadcast %79 : vector<16x1xf32> to vector<16x16xf32>
    %81 = arith.subf %77, %80 : vector<16x16xf32>
    %82 = math.exp %81 : vector<16x16xf32>
    %cst_28 = arith.constant dense<0.000000e+00> : vector<16xf32>
    %83 = vector.multi_reduction <add>, %82, %cst_28 [1] : vector<16x16xf32> to vector<16xf32>
    %84 = vector.shape_cast %83 : vector<16xf32> to vector<16x1xf32>
    %cst_29 = arith.constant 9.99999968E-21 : f32
    %85 = vector.broadcast %cst_29 : f32 to vector<16x1xf32>
    %86 = arith.maximumf %84, %85 : vector<16x1xf32>
    %87 = tpu.reciprocal %86 {approx = true} : vector<16x1xf32> -> vector<16x1xf32>
    %88 = vector.broadcast %87 : vector<16x1xf32> to vector<16x16xf32>
    %89 = arith.mulf %82, %88 : vector<16x16xf32>
    %90 = vector.extract_strided_slice %9 {offsets = [0, 32], sizes = [16, 16], strides = [1, 1]} : vector<16x64xbf16> to vector<16x16xbf16>
    %91 = arith.truncf %89 : vector<16x16xf32> to vector<16x16xbf16>
    %cst_30 = arith.constant dense<0.000000e+00> : vector<16x16xf32>
    %92 = tpu.matmul %91, %90, %cst_30 {dimension_numbers = #tpu.dot_dimension_numbers<[1], [0], [0], [1], [0, 0, 1, 1], [], []>} : vector<16x16xbf16>, vector<16x16xbf16>, vector<16x16xf32> -> vector<16x16xf32>
    %93 = vector.extract_strided_slice %12 {offsets = [0, 3], sizes = [16, 1], strides = [1, 1]} : vector<16x4xf32> to vector<16x1xf32>
    %94 = vector.extract_strided_slice %14 {offsets = [3, 0], sizes = [1, 16], strides = [1, 1]} : vector<4x16xf32> to vector<1x16xf32>
    %95 = vector.broadcast %93 : vector<16x1xf32> to vector<16x16xf32>
    %96 = vector.broadcast %94 : vector<1x16xf32> to vector<16x16xf32>
    %97 = arith.addf %95, %96 : vector<16x16xf32>
    %cst_31 = arith.constant 0.000000e+00 : f32
    %98 = vector.broadcast %cst_31 : f32 to vector<16x16xf32>
    %99 = arith.cmpf oge, %97, %98 : vector<16x16xf32>
    %cst_32 = arith.constant 2.000000e-01 : f32
    %100 = vector.broadcast %cst_32 : f32 to vector<16x16xf32>
    %101 = arith.mulf %100, %97 : vector<16x16xf32>
    %102 = arith.select %99, %97, %101 : vector<16x16xi1>, vector<16x16xf32>
    %103 = arith.addf %102, %1 : vector<16x16xf32>
    %cst_33 = arith.constant dense<0xFF800000> : vector<16xf32>
    %104 = vector.multi_reduction <maximumf>, %103, %cst_33 [1] : vector<16x16xf32> to vector<16xf32>
    %105 = vector.shape_cast %104 : vector<16xf32> to vector<16x1xf32>
    %106 = vector.broadcast %105 : vector<16x1xf32> to vector<16x16xf32>
    %107 = arith.subf %103, %106 : vector<16x16xf32>
    %108 = math.exp %107 : vector<16x16xf32>
    %cst_34 = arith.constant dense<0.000000e+00> : vector<16xf32>
    %109 = vector.multi_reduction <add>, %108, %cst_34 [1] : vector<16x16xf32> to vector<16xf32>
    %110 = vector.shape_cast %109 : vector<16xf32> to vector<16x1xf32>
    %cst_35 = arith.constant 9.99999968E-21 : f32
    %111 = vector.broadcast %cst_35 : f32 to vector<16x1xf32>
    %112 = arith.maximumf %110, %111 : vector<16x1xf32>
    %113 = tpu.reciprocal %112 {approx = true} : vector<16x1xf32> -> vector<16x1xf32>
    %114 = vector.broadcast %113 : vector<16x1xf32> to vector<16x16xf32>
    %115 = arith.mulf %108, %114 : vector<16x16xf32>
    %116 = vector.extract_strided_slice %9 {offsets = [0, 48], sizes = [16, 16], strides = [1, 1]} : vector<16x64xbf16> to vector<16x16xbf16>
    %117 = arith.truncf %115 : vector<16x16xf32> to vector<16x16xbf16>
    %cst_36 = arith.constant dense<0.000000e+00> : vector<16x16xf32>
    %118 = tpu.matmul %117, %116, %cst_36 {dimension_numbers = #tpu.dot_dimension_numbers<[1], [0], [0], [1], [0, 0, 1, 1], [], []>} : vector<16x16xbf16>, vector<16x16xbf16>, vector<16x16xf32> -> vector<16x16xf32>
    %119 = tpu.concatenate %40, %66, %92, %118 in 1 : vector<16x16xf32>, vector<16x16xf32>, vector<16x16xf32>, vector<16x16xf32> -> vector<16x64xf32>
    %120 = arith.addf %119, %10 : vector<16x64xf32>
    %121 = vector.broadcast %6 : vector<1x64xf32> to vector<16x64xf32>
    %122 = arith.addf %120, %121 : vector<16x64xf32>
    %cst_37 = arith.constant 0.000000e+00 : f32
    %123 = vector.broadcast %cst_37 : f32 to vector<16x64xf32>
    %124 = arith.cmpf ogt, %122, %123 : vector<16x64xf32>
    %125 = math.exp %122 : vector<16x64xf32>
    %cst_38 = arith.constant 1.000000e+00 : f32
    %126 = vector.broadcast %cst_38 : f32 to vector<16x64xf32>
    %127 = arith.subf %125, %126 : vector<16x64xf32>
    %128 = arith.select %124, %122, %127 : vector<16x64xi1>, vector<16x64xf32>
    %c0_39 = arith.constant 0 : index
    %c0_40 = arith.constant 0 : index
    %129 = vector.load %arg8[%c0_39, %c0_40] : memref<64x64xbf16, #tpu.memory_space<vmem>>, vector<64x64xbf16>
    %c0_41 = arith.constant 0 : index
    %c0_42 = arith.constant 0 : index
    %130 = vector.load %arg9[%c0_41, %c0_42] : memref<64x8xbf16, #tpu.memory_space<vmem>>, vector<64x8xbf16>
    %c0_43 = arith.constant 0 : index
    %c0_44 = arith.constant 0 : index
    %131 = vector.load %arg10[%c0_43, %c0_44] : memref<1x64xf32, #tpu.memory_space<vmem>>, vector<1x64xf32>
    %132 = arith.truncf %128 : vector<16x64xf32> to vector<16x64xbf16>
    %cst_45 = arith.constant dense<0.000000e+00> : vector<16x64xf32>
    %133 = tpu.matmul %132, %129, %cst_45 {dimension_numbers = #tpu.dot_dimension_numbers<[1], [0], [0], [1], [0, 0, 1, 1], [], []>} : vector<16x64xbf16>, vector<64x64xbf16>, vector<16x64xf32> -> vector<16x64xf32>
    %134 = arith.truncf %133 : vector<16x64xf32> to vector<16x64xbf16>
    %cst_46 = arith.constant dense<0.000000e+00> : vector<16x8xf32>
    %135 = tpu.matmul %134, %130, %cst_46 {dimension_numbers = #tpu.dot_dimension_numbers<[1], [0], [0], [1], [0, 0, 1, 1], [], []>} : vector<16x64xbf16>, vector<64x8xbf16>, vector<16x8xf32> -> vector<16x8xf32>
    %136 = vector.extract_strided_slice %135 {offsets = [0, 0], sizes = [16, 4], strides = [1, 1]} : vector<16x8xf32> to vector<16x4xf32>
    %137 = vector.extract_strided_slice %135 {offsets = [0, 4], sizes = [16, 4], strides = [1, 1]} : vector<16x8xf32> to vector<16x4xf32>
    %138 = tpu.transpose %137, [1, 0] : vector<16x4xf32> -> vector<4x16xf32>
    %139 = vector.extract_strided_slice %136 {offsets = [0, 0], sizes = [16, 1], strides = [1, 1]} : vector<16x4xf32> to vector<16x1xf32>
    %140 = vector.extract_strided_slice %138 {offsets = [0, 0], sizes = [1, 16], strides = [1, 1]} : vector<4x16xf32> to vector<1x16xf32>
    %141 = vector.broadcast %139 : vector<16x1xf32> to vector<16x16xf32>
    %142 = vector.broadcast %140 : vector<1x16xf32> to vector<16x16xf32>
    %143 = arith.addf %141, %142 : vector<16x16xf32>
    %cst_47 = arith.constant 0.000000e+00 : f32
    %144 = vector.broadcast %cst_47 : f32 to vector<16x16xf32>
    %145 = arith.cmpf oge, %143, %144 : vector<16x16xf32>
    %cst_48 = arith.constant 2.000000e-01 : f32
    %146 = vector.broadcast %cst_48 : f32 to vector<16x16xf32>
    %147 = arith.mulf %146, %143 : vector<16x16xf32>
    %148 = arith.select %145, %143, %147 : vector<16x16xi1>, vector<16x16xf32>
    %149 = arith.addf %148, %1 : vector<16x16xf32>
    %cst_49 = arith.constant dense<0xFF800000> : vector<16xf32>
    %150 = vector.multi_reduction <maximumf>, %149, %cst_49 [1] : vector<16x16xf32> to vector<16xf32>
    %151 = vector.shape_cast %150 : vector<16xf32> to vector<16x1xf32>
    %152 = vector.broadcast %151 : vector<16x1xf32> to vector<16x16xf32>
    %153 = arith.subf %149, %152 : vector<16x16xf32>
    %154 = math.exp %153 : vector<16x16xf32>
    %cst_50 = arith.constant dense<0.000000e+00> : vector<16xf32>
    %155 = vector.multi_reduction <add>, %154, %cst_50 [1] : vector<16x16xf32> to vector<16xf32>
    %156 = vector.shape_cast %155 : vector<16xf32> to vector<16x1xf32>
    %cst_51 = arith.constant 9.99999968E-21 : f32
    %157 = vector.broadcast %cst_51 : f32 to vector<16x1xf32>
    %158 = arith.maximumf %156, %157 : vector<16x1xf32>
    %159 = tpu.reciprocal %158 {approx = true} : vector<16x1xf32> -> vector<16x1xf32>
    %160 = vector.broadcast %159 : vector<16x1xf32> to vector<16x16xf32>
    %161 = arith.mulf %154, %160 : vector<16x16xf32>
    %162 = vector.extract_strided_slice %134 {offsets = [0, 0], sizes = [16, 16], strides = [1, 1]} : vector<16x64xbf16> to vector<16x16xbf16>
    %163 = arith.truncf %161 : vector<16x16xf32> to vector<16x16xbf16>
    %cst_52 = arith.constant dense<0.000000e+00> : vector<16x16xf32>
    %164 = tpu.matmul %163, %162, %cst_52 {dimension_numbers = #tpu.dot_dimension_numbers<[1], [0], [0], [1], [0, 0, 1, 1], [], []>} : vector<16x16xbf16>, vector<16x16xbf16>, vector<16x16xf32> -> vector<16x16xf32>
    %165 = vector.extract_strided_slice %136 {offsets = [0, 1], sizes = [16, 1], strides = [1, 1]} : vector<16x4xf32> to vector<16x1xf32>
    %166 = vector.extract_strided_slice %138 {offsets = [1, 0], sizes = [1, 16], strides = [1, 1]} : vector<4x16xf32> to vector<1x16xf32>
    %167 = vector.broadcast %165 : vector<16x1xf32> to vector<16x16xf32>
    %168 = vector.broadcast %166 : vector<1x16xf32> to vector<16x16xf32>
    %169 = arith.addf %167, %168 : vector<16x16xf32>
    %cst_53 = arith.constant 0.000000e+00 : f32
    %170 = vector.broadcast %cst_53 : f32 to vector<16x16xf32>
    %171 = arith.cmpf oge, %169, %170 : vector<16x16xf32>
    %cst_54 = arith.constant 2.000000e-01 : f32
    %172 = vector.broadcast %cst_54 : f32 to vector<16x16xf32>
    %173 = arith.mulf %172, %169 : vector<16x16xf32>
    %174 = arith.select %171, %169, %173 : vector<16x16xi1>, vector<16x16xf32>
    %175 = arith.addf %174, %1 : vector<16x16xf32>
    %cst_55 = arith.constant dense<0xFF800000> : vector<16xf32>
    %176 = vector.multi_reduction <maximumf>, %175, %cst_55 [1] : vector<16x16xf32> to vector<16xf32>
    %177 = vector.shape_cast %176 : vector<16xf32> to vector<16x1xf32>
    %178 = vector.broadcast %177 : vector<16x1xf32> to vector<16x16xf32>
    %179 = arith.subf %175, %178 : vector<16x16xf32>
    %180 = math.exp %179 : vector<16x16xf32>
    %cst_56 = arith.constant dense<0.000000e+00> : vector<16xf32>
    %181 = vector.multi_reduction <add>, %180, %cst_56 [1] : vector<16x16xf32> to vector<16xf32>
    %182 = vector.shape_cast %181 : vector<16xf32> to vector<16x1xf32>
    %cst_57 = arith.constant 9.99999968E-21 : f32
    %183 = vector.broadcast %cst_57 : f32 to vector<16x1xf32>
    %184 = arith.maximumf %182, %183 : vector<16x1xf32>
    %185 = tpu.reciprocal %184 {approx = true} : vector<16x1xf32> -> vector<16x1xf32>
    %186 = vector.broadcast %185 : vector<16x1xf32> to vector<16x16xf32>
    %187 = arith.mulf %180, %186 : vector<16x16xf32>
    %188 = vector.extract_strided_slice %134 {offsets = [0, 16], sizes = [16, 16], strides = [1, 1]} : vector<16x64xbf16> to vector<16x16xbf16>
    %189 = arith.truncf %187 : vector<16x16xf32> to vector<16x16xbf16>
    %cst_58 = arith.constant dense<0.000000e+00> : vector<16x16xf32>
    %190 = tpu.matmul %189, %188, %cst_58 {dimension_numbers = #tpu.dot_dimension_numbers<[1], [0], [0], [1], [0, 0, 1, 1], [], []>} : vector<16x16xbf16>, vector<16x16xbf16>, vector<16x16xf32> -> vector<16x16xf32>
    %191 = vector.extract_strided_slice %136 {offsets = [0, 2], sizes = [16, 1], strides = [1, 1]} : vector<16x4xf32> to vector<16x1xf32>
    %192 = vector.extract_strided_slice %138 {offsets = [2, 0], sizes = [1, 16], strides = [1, 1]} : vector<4x16xf32> to vector<1x16xf32>
    %193 = vector.broadcast %191 : vector<16x1xf32> to vector<16x16xf32>
    %194 = vector.broadcast %192 : vector<1x16xf32> to vector<16x16xf32>
    %195 = arith.addf %193, %194 : vector<16x16xf32>
    %cst_59 = arith.constant 0.000000e+00 : f32
    %196 = vector.broadcast %cst_59 : f32 to vector<16x16xf32>
    %197 = arith.cmpf oge, %195, %196 : vector<16x16xf32>
    %cst_60 = arith.constant 2.000000e-01 : f32
    %198 = vector.broadcast %cst_60 : f32 to vector<16x16xf32>
    %199 = arith.mulf %198, %195 : vector<16x16xf32>
    %200 = arith.select %197, %195, %199 : vector<16x16xi1>, vector<16x16xf32>
    %201 = arith.addf %200, %1 : vector<16x16xf32>
    %cst_61 = arith.constant dense<0xFF800000> : vector<16xf32>
    %202 = vector.multi_reduction <maximumf>, %201, %cst_61 [1] : vector<16x16xf32> to vector<16xf32>
    %203 = vector.shape_cast %202 : vector<16xf32> to vector<16x1xf32>
    %204 = vector.broadcast %203 : vector<16x1xf32> to vector<16x16xf32>
    %205 = arith.subf %201, %204 : vector<16x16xf32>
    %206 = math.exp %205 : vector<16x16xf32>
    %cst_62 = arith.constant dense<0.000000e+00> : vector<16xf32>
    %207 = vector.multi_reduction <add>, %206, %cst_62 [1] : vector<16x16xf32> to vector<16xf32>
    %208 = vector.shape_cast %207 : vector<16xf32> to vector<16x1xf32>
    %cst_63 = arith.constant 9.99999968E-21 : f32
    %209 = vector.broadcast %cst_63 : f32 to vector<16x1xf32>
    %210 = arith.maximumf %208, %209 : vector<16x1xf32>
    %211 = tpu.reciprocal %210 {approx = true} : vector<16x1xf32> -> vector<16x1xf32>
    %212 = vector.broadcast %211 : vector<16x1xf32> to vector<16x16xf32>
    %213 = arith.mulf %206, %212 : vector<16x16xf32>
    %214 = vector.extract_strided_slice %134 {offsets = [0, 32], sizes = [16, 16], strides = [1, 1]} : vector<16x64xbf16> to vector<16x16xbf16>
    %215 = arith.truncf %213 : vector<16x16xf32> to vector<16x16xbf16>
    %cst_64 = arith.constant dense<0.000000e+00> : vector<16x16xf32>
    %216 = tpu.matmul %215, %214, %cst_64 {dimension_numbers = #tpu.dot_dimension_numbers<[1], [0], [0], [1], [0, 0, 1, 1], [], []>} : vector<16x16xbf16>, vector<16x16xbf16>, vector<16x16xf32> -> vector<16x16xf32>
    %217 = vector.extract_strided_slice %136 {offsets = [0, 3], sizes = [16, 1], strides = [1, 1]} : vector<16x4xf32> to vector<16x1xf32>
    %218 = vector.extract_strided_slice %138 {offsets = [3, 0], sizes = [1, 16], strides = [1, 1]} : vector<4x16xf32> to vector<1x16xf32>
    %219 = vector.broadcast %217 : vector<16x1xf32> to vector<16x16xf32>
    %220 = vector.broadcast %218 : vector<1x16xf32> to vector<16x16xf32>
    %221 = arith.addf %219, %220 : vector<16x16xf32>
    %cst_65 = arith.constant 0.000000e+00 : f32
    %222 = vector.broadcast %cst_65 : f32 to vector<16x16xf32>
    %223 = arith.cmpf oge, %221, %222 : vector<16x16xf32>
    %cst_66 = arith.constant 2.000000e-01 : f32
    %224 = vector.broadcast %cst_66 : f32 to vector<16x16xf32>
    %225 = arith.mulf %224, %221 : vector<16x16xf32>
    %226 = arith.select %223, %221, %225 : vector<16x16xi1>, vector<16x16xf32>
    %227 = arith.addf %226, %1 : vector<16x16xf32>
    %cst_67 = arith.constant dense<0xFF800000> : vector<16xf32>
    %228 = vector.multi_reduction <maximumf>, %227, %cst_67 [1] : vector<16x16xf32> to vector<16xf32>
    %229 = vector.shape_cast %228 : vector<16xf32> to vector<16x1xf32>
    %230 = vector.broadcast %229 : vector<16x1xf32> to vector<16x16xf32>
    %231 = arith.subf %227, %230 : vector<16x16xf32>
    %232 = math.exp %231 : vector<16x16xf32>
    %cst_68 = arith.constant dense<0.000000e+00> : vector<16xf32>
    %233 = vector.multi_reduction <add>, %232, %cst_68 [1] : vector<16x16xf32> to vector<16xf32>
    %234 = vector.shape_cast %233 : vector<16xf32> to vector<16x1xf32>
    %cst_69 = arith.constant 9.99999968E-21 : f32
    %235 = vector.broadcast %cst_69 : f32 to vector<16x1xf32>
    %236 = arith.maximumf %234, %235 : vector<16x1xf32>
    %237 = tpu.reciprocal %236 {approx = true} : vector<16x1xf32> -> vector<16x1xf32>
    %238 = vector.broadcast %237 : vector<16x1xf32> to vector<16x16xf32>
    %239 = arith.mulf %232, %238 : vector<16x16xf32>
    %240 = vector.extract_strided_slice %134 {offsets = [0, 48], sizes = [16, 16], strides = [1, 1]} : vector<16x64xbf16> to vector<16x16xbf16>
    %241 = arith.truncf %239 : vector<16x16xf32> to vector<16x16xbf16>
    %cst_70 = arith.constant dense<0.000000e+00> : vector<16x16xf32>
    %242 = tpu.matmul %241, %240, %cst_70 {dimension_numbers = #tpu.dot_dimension_numbers<[1], [0], [0], [1], [0, 0, 1, 1], [], []>} : vector<16x16xbf16>, vector<16x16xbf16>, vector<16x16xf32> -> vector<16x16xf32>
    %243 = arith.addf %164, %190 : vector<16x16xf32>
    %244 = arith.addf %243, %216 : vector<16x16xf32>
    %245 = arith.addf %244, %242 : vector<16x16xf32>
    %246 = vector.extract_strided_slice %128 {offsets = [0, 0], sizes = [16, 16], strides = [1, 1]} : vector<16x64xf32> to vector<16x16xf32>
    %247 = vector.extract_strided_slice %131 {offsets = [0, 0], sizes = [1, 16], strides = [1, 1]} : vector<1x64xf32> to vector<1x16xf32>
    %248 = vector.extract_strided_slice %128 {offsets = [0, 16], sizes = [16, 16], strides = [1, 1]} : vector<16x64xf32> to vector<16x16xf32>
    %249 = arith.addf %246, %248 : vector<16x16xf32>
    %250 = vector.extract_strided_slice %131 {offsets = [0, 16], sizes = [1, 16], strides = [1, 1]} : vector<1x64xf32> to vector<1x16xf32>
    %251 = arith.addf %247, %250 : vector<1x16xf32>
    %252 = vector.extract_strided_slice %128 {offsets = [0, 32], sizes = [16, 16], strides = [1, 1]} : vector<16x64xf32> to vector<16x16xf32>
    %253 = arith.addf %249, %252 : vector<16x16xf32>
    %254 = vector.extract_strided_slice %131 {offsets = [0, 32], sizes = [1, 16], strides = [1, 1]} : vector<1x64xf32> to vector<1x16xf32>
    %255 = arith.addf %251, %254 : vector<1x16xf32>
    %256 = vector.extract_strided_slice %128 {offsets = [0, 48], sizes = [16, 16], strides = [1, 1]} : vector<16x64xf32> to vector<16x16xf32>
    %257 = arith.addf %253, %256 : vector<16x16xf32>
    %258 = vector.extract_strided_slice %131 {offsets = [0, 48], sizes = [1, 16], strides = [1, 1]} : vector<1x64xf32> to vector<1x16xf32>
    %259 = arith.addf %255, %258 : vector<1x16xf32>
    %260 = arith.addf %245, %257 : vector<16x16xf32>
    %261 = vector.broadcast %259 : vector<1x16xf32> to vector<16x16xf32>
    %262 = arith.addf %260, %261 : vector<16x16xf32>
    %cst_71 = arith.constant 2.500000e-01 : f32
    %263 = vector.broadcast %cst_71 : f32 to vector<16x16xf32>
    %264 = arith.mulf %262, %263 : vector<16x16xf32>
    %c0_72 = arith.constant 0 : index
    %c0_73 = arith.constant 0 : index
    %265 = vector.load %arg3[%c0_72, %c0_73] : memref<16x2xf32, #tpu.memory_space<vmem>>, vector<16x2xf32>
    %c0_74 = arith.constant 0 : index
    %c0_75 = arith.constant 0 : index
    %266 = vector.load %arg11[%c0_74, %c0_75] : memref<1x16xf32, #tpu.memory_space<vmem>>, vector<1x16xf32>
    %267 = vector.broadcast %266 : vector<1x16xf32> to vector<16x16xf32>
    %268 = arith.mulf %264, %267 : vector<16x16xf32>
    %cst_76 = arith.constant dense<0.000000e+00> : vector<16xf32>
    %269 = vector.multi_reduction <add>, %268, %cst_76 [1] : vector<16x16xf32> to vector<16xf32>
    %270 = vector.shape_cast %269 : vector<16xf32> to vector<16x1xf32>
    %c0_77 = arith.constant 0 : index
    %c0_78 = arith.constant 0 : index
    %271 = vector.load %arg12[%c0_77, %c0_78] : memref<1x1xf32, #tpu.memory_space<vmem>>, vector<1x1xf32>
    %272 = vector.broadcast %271 : vector<1x1xf32> to vector<16x1xf32>
    %273 = arith.addf %270, %272 : vector<16x1xf32>
    %274 = arith.negf %273 : vector<16x1xf32>
    %275 = math.exp %274 : vector<16x1xf32>
    %cst_79 = arith.constant 1.000000e+00 : f32
    %276 = vector.broadcast %cst_79 : f32 to vector<16x1xf32>
    %277 = arith.addf %276, %275 : vector<16x1xf32>
    %278 = arith.divf %276, %277 : vector<16x1xf32>
    %279 = vector.broadcast %278 : vector<16x1xf32> to vector<16x16xf32>
    %280 = arith.mulf %264, %279 : vector<16x16xf32>
    %281 = arith.truncf %280 : vector<16x16xf32> to vector<16x16xbf16>
    %282 = arith.truncf %265 : vector<16x2xf32> to vector<16x2xbf16>
    %cst_80 = arith.constant dense<0.000000e+00> : vector<2x16xf32>
    %283 = tpu.matmul %282, %281, %cst_80 {dimension_numbers = #tpu.dot_dimension_numbers<[0], [0], [1], [1], [0, 1, 1, 1], [], []>} : vector<16x2xbf16>, vector<16x16xbf16>, vector<2x16xf32> -> vector<2x16xf32>
    %284 = vector.extract_strided_slice %265 {offsets = [0, 0], sizes = [16, 1], strides = [1, 1]} : vector<16x2xf32> to vector<16x1xf32>
    %cst_81 = arith.constant 0.000000e+00 : f32
    %285 = vector.broadcast %cst_81 : f32 to vector<16x1xf32>
    %286 = arith.cmpf ogt, %284, %285 : vector<16x1xf32>
    %cst_82 = arith.constant -1.000000e+30 : f32
    %287 = vector.shape_cast %286 : vector<16x1xi1> to vector<16x1xi1>
    %288 = vector.broadcast %287 : vector<16x1xi1> to vector<16x16xi1>
    %289 = vector.broadcast %cst_82 : f32 to vector<16x16xf32>
    %290 = arith.select %288, %264, %289 : vector<16x16xi1>, vector<16x16xf32>
    %cst_83 = arith.constant dense<0xFF800000> : vector<16xf32>
    %291 = vector.multi_reduction <maximumf>, %290, %cst_83 [0] : vector<16x16xf32> to vector<16xf32>
    %292 = vector.shape_cast %291 : vector<16xf32> to vector<1x16xf32>
    %293 = vector.extract_strided_slice %265 {offsets = [0, 1], sizes = [16, 1], strides = [1, 1]} : vector<16x2xf32> to vector<16x1xf32>
    %cst_84 = arith.constant 0.000000e+00 : f32
    %294 = vector.broadcast %cst_84 : f32 to vector<16x1xf32>
    %295 = arith.cmpf ogt, %293, %294 : vector<16x1xf32>
    %cst_85 = arith.constant -1.000000e+30 : f32
    %296 = vector.shape_cast %295 : vector<16x1xi1> to vector<16x1xi1>
    %297 = vector.broadcast %296 : vector<16x1xi1> to vector<16x16xi1>
    %298 = vector.broadcast %cst_85 : f32 to vector<16x16xf32>
    %299 = arith.select %297, %264, %298 : vector<16x16xi1>, vector<16x16xf32>
    %cst_86 = arith.constant dense<0xFF800000> : vector<16xf32>
    %300 = vector.multi_reduction <maximumf>, %299, %cst_86 [0] : vector<16x16xf32> to vector<16xf32>
    %301 = vector.shape_cast %300 : vector<16xf32> to vector<1x16xf32>
    %302 = tpu.concatenate %292, %301 in 0 : vector<1x16xf32>, vector<1x16xf32> -> vector<2x16xf32>
    %303 = tpu.concatenate %283, %302 in 1 : vector<2x16xf32>, vector<2x16xf32> -> vector<2x32xf32>
    %c0_87 = arith.constant 0 : index
    %c0_88 = arith.constant 0 : index
    %304 = vector.load %arg13[%c0_87, %c0_88] : memref<2x32xf32, #tpu.memory_space<vmem>>, vector<2x32xf32>
    tpu.vector_store %arg13[%c0_87, %c0_88], %303 {strides = array<i32>} : memref<2x32xf32, #tpu.memory_space<vmem>>, vector<2x32xf32>,
    return
  }
  func.func @transform_0(%arg0: i32) -> (i32, i32) {
    %c0_i32 = arith.constant 0 : i32
    %c0_i32_0 = arith.constant 0 : i32
    %c0_i32_1 = arith.constant 0 : i32
    return %c0_i32, %c0_i32_0 : i32, i32
  }
  func.func @transform_1(%arg0: i32) -> (i32, i32) {
    %c0_i32 = arith.constant 0 : i32
    %c0_i32_0 = arith.constant 0 : i32
    %c0_i32_1 = arith.constant 0 : i32
    return %c0_i32, %c0_i32_0 : i32, i32
  }
  func.func @transform_2(%arg0: i32) -> (i32, i32) {
    %c0_i32 = arith.constant 0 : i32
    %c0_i32_0 = arith.constant 0 : i32
    %c0_i32_1 = arith.constant 0 : i32
    return %c0_i32, %c0_i32_0 : i32, i32
  }
  func.func @transform_3(%arg0: i32) -> (i32, i32) {
    %c0_i32 = arith.constant 0 : i32
    %c0_i32_0 = arith.constant 0 : i32
    %c0_i32_1 = arith.constant 0 : i32
    return %c0_i32, %c0_i32_0 : i32, i32
  }
  func.func @transform_4(%arg0: i32) -> (i32, i32) {
    %c0_i32 = arith.constant 0 : i32
    %c0_i32_0 = arith.constant 0 : i32
    %c0_i32_1 = arith.constant 0 : i32
    return %c0_i32, %c0_i32_0 : i32, i32
  }
  func.func @transform_5(%arg0: i32) -> (i32, i32) {
    %c0_i32 = arith.constant 0 : i32
    %c0_i32_0 = arith.constant 0 : i32
    %c0_i32_1 = arith.constant 0 : i32
    return %c0_i32, %c0_i32_0 : i32, i32
  }
  func.func @transform_6(%arg0: i32) -> (i32, i32) {
    %c0_i32 = arith.constant 0 : i32
    %c0_i32_0 = arith.constant 0 : i32
    %c0_i32_1 = arith.constant 0 : i32
    return %c0_i32, %c0_i32_0 : i32, i32
  }
  func.func @transform_7(%arg0: i32) -> (i32, i32) {
    %c0_i32 = arith.constant 0 : i32
    %c0_i32_0 = arith.constant 0 : i32
    %c0_i32_1 = arith.constant 0 : i32
    return %c0_i32, %c0_i32_0 : i32, i32
  }
  func.func @transform_8(%arg0: i32) -> (i32, i32) {
    %c0_i32 = arith.constant 0 : i32
    %c0_i32_0 = arith.constant 0 : i32
    %c0_i32_1 = arith.constant 0 : i32
    return %c0_i32, %c0_i32_0 : i32, i32
  }
  func.func @transform_9(%arg0: i32) -> (i32, i32) {
    %c0_i32 = arith.constant 0 : i32
    %c0_i32_0 = arith.constant 0 : i32
    %c0_i32_1 = arith.constant 0 : i32
    return %c0_i32, %c0_i32_0 : i32, i32
  }
  func.func @transform_10(%arg0: i32) -> (i32, i32) {
    %c0_i32 = arith.constant 0 : i32
    %c0_i32_0 = arith.constant 0 : i32
    %c0_i32_1 = arith.constant 0 : i32
    return %c0_i32, %c0_i32_0 : i32, i32
  }
  func.func @transform_11(%arg0: i32) -> (i32, i32) {
    %c0_i32 = arith.constant 0 : i32
    %c0_i32_0 = arith.constant 0 : i32
    %c0_i32_1 = arith.constant 0 : i32
    return %c0_i32, %c0_i32_0 : i32, i32
  }
  func.func @transform_12(%arg0: i32) -> (i32, i32) {
    %c0_i32 = arith.constant 0 : i32
    %c0_i32_0 = arith.constant 0 : i32
    %c0_i32_1 = arith.constant 0 : i32
    return %c0_i32, %c0_i32_0 : i32, i32
  }
}

</mosaic_0001>

<llo_original>
// kernel: tpu_custom_call.1
$region0: #{tpu_custom_call.1}
  #allocation0 [shape = 'u32[]', space=smem, size = 0x4, offset = 0x4, fixed_abs, tag = 'smem constant byte address 0x4 - core index']
  #allocation1 [shape = 'u32[144,128]{1,0:T(1,128)}', space=vmem, size = 0x12000, scoped, tag = 'internal scratch']
  #allocation2 [shape = 'f32[1,1]{1,0:T(1,128)S(1)}', space=vmem, size = 0x200, scoped, tag = 'scoped memory for tpu_custom_call.1']
  %s0 = inlined_call_operand.vmem [shape: f32[16,32], index: 0, kind: input, shape index: {}]
  %s1 = inlined_call_operand.vmem [shape: bf16[16,16], index: 1, kind: input, shape index: {}]
  %s2 = inlined_call_operand.vmem [shape: f32[16,2], index: 2, kind: input, shape index: {}]
  %s3 = inlined_call_operand.vmem [shape: bf16[32,64], index: 3, kind: input, shape index: {}]
  %s4 = inlined_call_operand.vmem [shape: bf16[64,8], index: 4, kind: input, shape index: {}]
  %s5 = inlined_call_operand.vmem [shape: bf16[32,64], index: 5, kind: input, shape index: {}]
  %s6 = inlined_call_operand.vmem [shape: f32[1,64], index: 6, kind: input, shape index: {}]
  %s7 = inlined_call_operand.vmem [shape: bf16[64,64], index: 7, kind: input, shape index: {}]
  %s8 = inlined_call_operand.vmem [shape: bf16[64,8], index: 8, kind: input, shape index: {}]
  %s9 = inlined_call_operand.vmem [shape: f32[1,64], index: 9, kind: input, shape index: {}]
  %s10 = inlined_call_operand.vmem [shape: f32[1,16], index: 10, kind: input, shape index: {}]
  %s11 = inlined_call_operand.<no memory space> [shape: f32[1,1], index: 11, kind: input, shape index: {}]
  %s12 = inlined_call_operand.hbm [shape: f32[2,32], index: 12, kind: output, shape index: {}]
  %s13 = sld [smem:[#allocation0]]
  $region58: #{tpu_custom_call.1} parent=0
    _
  %s15 = ssub.s32 1, %s13
  %s16 = scalar_select 0, %s15, %s13
  %v17 = vstv %s11
  %18 = vst [vmem:[#allocation2] sm:$0x1] %v17
  $region1: #{tpu_custom_call.1} parent=0
    #allocation3 [shape = 'u8[1024]{0}', space=vmem, size = 0x400, scoped, tag = 'output window, operand 0, single buffered']
    #allocation4 [shape = 's32[1]{0}', space=sflag, size = 0x4, scoped, tag = 'scoped memory for tpu_custom_call.1']
    %19 = vsyncpa [#allocation4], 0
    // Predicated region
    $region2: #{tpu_custom_call.1} parent=1 // pred_check
      _
    $region3: #{tpu_custom_call.1} parent=1 // pred_check_branch
      %21 = sbr.rel (0) target = $region5
    $region4: #{tpu_custom_call.1} parent=1 // pred_region
      _
    $region5: #{tpu_custom_call.1} parent=1 // pred_fallthru
      _
    // Predicated region
    $region6: #{tpu_custom_call.1} parent=1 // pred_check
      _
    $region7: #{tpu_custom_call.1} parent=1 // pred_check_branch
      %23 = sbr.rel (0) target = $region9
    $region8: #{tpu_custom_call.1} parent=1 // pred_region
      _
    $region9: #{tpu_custom_call.1} parent=1 // pred_fallthru
      _
    // Predicated region
    $region10: #{tpu_custom_call.1} parent=1 // pred_check
      _
    $region11: #{tpu_custom_call.1} parent=1 // pred_check_branch
      %25 = sbr.rel (0) target = $region13
    $region12: #{tpu_custom_call.1} parent=1 // pred_region
      _
    $region13: #{tpu_custom_call.1} parent=1 // pred_fallthru
      _
    // Predicated region
    $region14: #{tpu_custom_call.1} parent=1 // pred_check
      _
    $region15: #{tpu_custom_call.1} parent=1 // pred_check_branch
      %27 = sbr.rel (0) target = $region17
    $region16: #{tpu_custom_call.1} parent=1 // pred_region
      _
    $region17: #{tpu_custom_call.1} parent=1 // pred_fallthru
      _
    // Predicated region
    $region18: #{tpu_custom_call.1} parent=1 // pred_check
      _
    $region19: #{tpu_custom_call.1} parent=1 // pred_check_branch
      %29 = sbr.rel (0) target = $region21
    $region20: #{tpu_custom_call.1} parent=1 // pred_region
      _
    $region21: #{tpu_custom_call.1} parent=1 // pred_fallthru
      _
    // Predicated region
    $region22: #{tpu_custom_call.1} parent=1 // pred_check
      _
    $region23: #{tpu_custom_call.1} parent=1 // pred_check_branch
      %31 = sbr.rel (0) target = $region25
    $region24: #{tpu_custom_call.1} parent=1 // pred_region
      _
    $region25: #{tpu_custom_call.1} parent=1 // pred_fallthru
      _
    // Predicated region
    $region26: #{tpu_custom_call.1} parent=1 // pred_check
      _
    $region27: #{tpu_custom_call.1} parent=1 // pred_check_branch
      %33 = sbr.rel (0) target = $region29
    $region28: #{tpu_custom_call.1} parent=1 // pred_region
      _
    $region29: #{tpu_custom_call.1} parent=1 // pred_fallthru
      _
    // Predicated region
    $region30: #{tpu_custom_call.1} parent=1 // pred_check
      _
    $region31: #{tpu_custom_call.1} parent=1 // pred_check_branch
      %35 = sbr.rel (0) target = $region33
    $region32: #{tpu_custom_call.1} parent=1 // pred_region
      _
    $region33: #{tpu_custom_call.1} parent=1 // pred_fallthru
      _
    // Predicated region
    $region34: #{tpu_custom_call.1} parent=1 // pred_check
      _
    $region35: #{tpu_custom_call.1} parent=1 // pred_check_branch
      %37 = sbr.rel (0) target = $region37
    $region36: #{tpu_custom_call.1} parent=1 // pred_region
      _
    $region37: #{tpu_custom_call.1} parent=1 // pred_fallthru
      _
    // Predicated region
    $region38: #{tpu_custom_call.1} parent=1 // pred_check
      _
    $region39: #{tpu_custom_call.1} parent=1 // pred_check_branch
      %39 = sbr.rel (0) target = $region41
    $region40: #{tpu_custom_call.1} parent=1 // pred_region
      _
    $region41: #{tpu_custom_call.1} parent=1 // pred_fallthru
      _
    // Predicated region
    $region42: #{tpu_custom_call.1} parent=1 // pred_check
      _
    $region43: #{tpu_custom_call.1} parent=1 // pred_check_branch
      %41 = sbr.rel (0) target = $region45
    $region44: #{tpu_custom_call.1} parent=1 // pred_region
      _
    $region45: #{tpu_custom_call.1} parent=1 // pred_fallthru
      _
    // Predicated region
    $region46: #{tpu_custom_call.1} parent=1 // pred_check
      _
    $region47: #{tpu_custom_call.1} parent=1 // pred_check_branch
      %43 = sbr.rel (0) target = $region49
    $region48: #{tpu_custom_call.1} parent=1 // pred_region
      _
    $region49: #{tpu_custom_call.1} parent=1 // pred_fallthru
      _
    %v45 = vld [vmem:[%s1] sm:$0xf]
    %v46 = vld [vmem:[%s1 + $0x4] sm:$0xf]
    %v47 = vunpack.c.l.bf16 %v45
    %v48 = vunpack.c.l.bf16 %v46
    %v49 = vld [vmem:[%s0] sm:$0xff]
    %v50 = vld [vmem:[%s0 + $0x8] sm:$0xff]
    %v51 = vld [vmem:[%s3] sm:$0xf]
    %v52 = vld [vmem:[%s3 + $0x4] sm:$0xf]
    %v53 = vld [vmem:[%s3 + $0x8] sm:$0xf]
    %v54 = vld [vmem:[%s3 + $0xc] sm:$0xf]
    %v55 = vld [vmem:[%s4] sm:$0xf]
    %v56 = vld [vmem:[%s4 + $0x4] sm:$0xf]
    %v57 = vld [vmem:[%s4 + $0x8] sm:$0xf]
    %v58 = vld [vmem:[%s4 + $0xc] sm:$0xf]
    %v59 = vld [vmem:[%s4 + $0x10] sm:$0xf]
    %v60 = vld [vmem:[%s4 + $0x14] sm:$0xf]
    %v61 = vld [vmem:[%s4 + $0x18] sm:$0xf]
    %v62 = vld [vmem:[%s4 + $0x1c] sm:$0xf]
    %v63 = vld [vmem:[%s5] sm:$0xf]
    %v64 = vld [vmem:[%s5 + $0x4] sm:$0xf]
    %v65 = vld [vmem:[%s5 + $0x8] sm:$0xf]
    %v66 = vld [vmem:[%s5 + $0xc] sm:$0xf]
    %v67 = vld [vmem:[%s6] sm:$0x1]
    %v68 = vpack.c.bf16 %v50, %v49
    %v73 = vunpack.c.l.b16 %v51
    %v74 = vunpack.c.l.b16 %v52
    %v75 = vunpack.c.l.b16 %v53
    %v76 = vunpack.c.l.b16 %v54
    %v77 = vpack.c.b16 %v74, %v73
    %v78 = vpack.c.b16 %v76, %v75
    %vm81 = vcmask 261120
    %v83 = vsel %vm81, %v68, 0
    %85 = vmatprep.subr.bf16.mxu0 0
    %86 = vmatpush1.bf16.msra.mxu0 0
    %87 = vmatprep.subr.bf16.mxu0 0
    %88 = vmatpush1.bf16.msra.mxu0 0
    %89 = vmatprep.subr.bf16.mxu0 0
    %90 = vmatpush1.bf16.msra.mxu0 0
    %91 = vmatprep.subr.bf16.mxu0 0
    %92 = vmatpush1.bf16.msra.mxu0 0
    %93 = vmatprep.subr.bf16.mxu0 0
    %94 = vmatpush1.bf16.msra.mxu0 0
    %95 = vmatprep.subr.bf16.mxu0 0
    %96 = vmatpush1.bf16.msra.mxu0 0
    %97 = vmatprep.subr.bf16.mxu0 0
    %98 = vmatpush1.bf16.msra.mxu0 %v78
    %99 = vmatprep.subr.bf16.mxu0 0
    %100 = vmatpush1.bf16.msra.mxu0 %v77
    %101 = vmatprep.subr.bf16.mxu0 0
    %102 = vmatpush2.bf16.msra.mxu0 0
    %103 = vmatprep.subr.bf16.mxu0 0
    %104 = vmatpush2.bf16.msra.mxu0 0
    %105 = vmatprep.subr.bf16.mxu0 0
    %106 = vmatpush2.bf16.msra.mxu0 0
    %107 = vmatprep.subr.bf16.mxu0 0
    %108 = vmatpush2.bf16.msra.mxu0 0
    %109 = vmatprep.subr.bf16.mxu0 0
    %110 = vmatpush2.bf16.msra.mxu0 0
    %111 = vmatprep.subr.bf16.mxu0 0
    %112 = vmatpush2.bf16.msra.mxu0 0
    %113 = vmatprep.subr.bf16.mxu0 0
    %114 = vmatpush2.bf16.msra.mxu0 0
    %115 = vmatprep.subr.bf16.mxu0 0
    %116 = vmatpush2.bf16.msra.mxu0 0
    %117 = vmatprep.mubr.bf16.mxu0 0
    %118 = vmatmul.mubr.bf16.gmra.mxu0 %v83
    %v119 = vpop.f32.mrf.mxu0
    %v120 = vadd.f32 0.0, %v119
    %v121 = vpop.f32.mrf.mxu0
    %v122 = vpop.f32.mrf.mxu0
    %v123 = vadd.f32 0.0, %v122
    %v124 = vpop.f32.mrf.mxu0
    %125 = vdwg.mxu0
    %v126 = vpack.c.bf16 %v123, %v120
    %v131 = vunpack.c.l.b16 %v63
    %v132 = vunpack.c.l.b16 %v64
    %v133 = vunpack.c.l.b16 %v65
    %v134 = vunpack.c.l.b16 %v66
    %v135 = vpack.c.b16 %v132, %v131
    %v136 = vpack.c.b16 %v134, %v133
    %139 = vmatprep.subr.bf16.mxu0 0
    %140 = vmatpush1.bf16.msra.mxu0 0
    %141 = vmatprep.subr.bf16.mxu0 0
    %142 = vmatpush1.bf16.msra.mxu0 0
    %143 = vmatprep.subr.bf16.mxu0 0
    %144 = vmatpush1.bf16.msra.mxu0 0
    %145 = vmatprep.subr.bf16.mxu0 0
    %146 = vmatpush1.bf16.msra.mxu0 0
    %147 = vmatprep.subr.bf16.mxu0 0
    %148 = vmatpush1.bf16.msra.mxu0 0
    %149 = vmatprep.subr.bf16.mxu0 0
    %150 = vmatpush1.bf16.msra.mxu0 0
    %151 = vmatprep.subr.bf16.mxu0 0
    %152 = vmatpush1.bf16.msra.mxu0 %v136
    %153 = vmatprep.subr.bf16.mxu0 0
    %154 = vmatpush1.bf16.msra.mxu0 %v135
    %155 = vmatprep.subr.bf16.mxu0 0
    %156 = vmatpush2.bf16.msra.mxu0 0
    %157 = vmatprep.subr.bf16.mxu0 0
    %158 = vmatpush2.bf16.msra.mxu0 0
    %159 = vmatprep.subr.bf16.mxu0 0
    %160 = vmatpush2.bf16.msra.mxu0 0
    %161 = vmatprep.subr.bf16.mxu0 0
    %162 = vmatpush2.bf16.msra.mxu0 0
    %163 = vmatprep.subr.bf16.mxu0 0
    %164 = vmatpush2.bf16.msra.mxu0 0
    %165 = vmatprep.subr.bf16.mxu0 0
    %166 = vmatpush2.bf16.msra.mxu0 0
    %167 = vmatprep.subr.bf16.mxu0 0
    %168 = vmatpush2.bf16.msra.mxu0 0
    %169 = vmatprep.subr.bf16.mxu0 0
    %170 = vmatpush2.bf16.msra.mxu0 0
    %171 = vmatprep.mubr.bf16.mxu0 0
    %172 = vmatmul.mubr.bf16.gmra.mxu0 %v83
    %v173 = vpop.f32.mrf.mxu0
    %v174 = vadd.f32 0.0, %v173
    %v175 = vpop.f32.mrf.mxu0
    %v176 = vpop.f32.mrf.mxu0
    %v177 = vadd.f32 0.0, %v176
    %v178 = vpop.f32.mrf.mxu0
    %179 = vdwg.mxu0
    %v188 = vunpack.c.l.b16 %v55
    %v189 = vunpack.c.l.b16 %v56
    %v190 = vunpack.c.l.b16 %v57
    %v191 = vunpack.c.l.b16 %v58
    %v192 = vunpack.c.l.b16 %v59
    %v193 = vunpack.c.l.b16 %v60
    %v194 = vunpack.c.l.b16 %v61
    %v195 = vunpack.c.l.b16 %v62
    %v196 = vpack.c.b16 %v189, %v188
    %v197 = vpack.c.b16 %v191, %v190
    %v198 = vpack.c.b16 %v193, %v192
    %v199 = vpack.c.b16 %v195, %v194
    %vm204 = vcmask 523264
    %v206 = vsel %vm204, %v126, 0
    %208 = vmatprep.subr.bf16.mxu0 0
    %209 = vmatpush1.bf16.msra.mxu0 0
    %210 = vmatprep.subr.bf16.mxu0 0
    %211 = vmatpush1.bf16.msra.mxu0 0
    %212 = vmatprep.subr.bf16.mxu0 0
    %213 = vmatpush1.bf16.msra.mxu0 0
    %214 = vmatprep.subr.bf16.mxu0 0
    %215 = vmatpush1.bf16.msra.mxu0 0
    %216 = vmatprep.subr.bf16.mxu0 0
    %217 = vmatpush1.bf16.msra.mxu0 %v199
    %218 = vmatprep.subr.bf16.mxu0 0
    %219 = vmatpush1.bf16.msra.mxu0 %v198
    %220 = vmatprep.subr.bf16.mxu0 0
    %221 = vmatpush1.bf16.msra.mxu0 %v197
    %222 = vmatprep.subr.bf16.mxu0 0
    %223 = vmatpush1.bf16.msra.mxu0 %v196
    %224 = vmatprep.subr.bf16.mxu0 0
    %225 = vmatpush2.bf16.msra.mxu0 0
    %226 = vmatprep.subr.bf16.mxu0 0
    %227 = vmatpush2.bf16.msra.mxu0 0
    %228 = vmatprep.subr.bf16.mxu0 0
    %229 = vmatpush2.bf16.msra.mxu0 0
    %230 = vmatprep.subr.bf16.mxu0 0
    %231 = vmatpush2.bf16.msra.mxu0 0
    %232 = vmatprep.subr.bf16.mxu0 0
    %233 = vmatpush2.bf16.msra.mxu0 0
    %234 = vmatprep.subr.bf16.mxu0 0
    %235 = vmatpush2.bf16.msra.mxu0 0
    %236 = vmatprep.subr.bf16.mxu0 0
    %237 = vmatpush2.bf16.msra.mxu0 0
    %238 = vmatprep.subr.bf16.mxu0 0
    %239 = vmatpush2.bf16.msra.mxu0 0
    %240 = vmatprep.mubr.bf16.mxu0 0
    %241 = vmatmul.mubr.bf16.gmra.mxu0 %v206
    %v242 = vpop.f32.mrf.mxu0
    %v243 = vadd.f32 0.0, %v242
    %v244 = vpop.f32.mrf.mxu0
    %v245 = vpop.f32.mrf.mxu0
    %v246 = vadd.f32 0.0, %v245
    %v247 = vpop.f32.mrf.mxu0
    %248 = vdwg.mxu0
    %251 = vrot.lane.b32.xlu0 %v243, 124
    %v252 = vpop.permute.xlu0 %251
    %253 = vrot.lane.b32.xlu0 %v246, 124
    %v254 = vpop.permute.xlu0 %253
    %257 = vxpose.xlu0.b32.start [1/16] %v252, 128
    %258 = vxpose.xlu0.b32.cont [2/16] %v254, 128
    %259 = vxpose.xlu0.b32.cont [3/16] 0.0, 128
    %260 = vxpose.xlu0.b32.cont [4/16] 0.0, 128
    %261 = vxpose.xlu0.b32.cont [5/16] 0.0, 128
    %262 = vxpose.xlu0.b32.cont [6/16] 0.0, 128
    %263 = vxpose.xlu0.b32.cont [7/16] 0.0, 128
    %264 = vxpose.xlu0.b32.cont [8/16] 0.0, 128
    %265 = vxpose.xlu0.b32.cont [9/16] 0.0, 128
    %266 = vxpose.xlu0.b32.cont [10/16] 0.0, 128
    %267 = vxpose.xlu0.b32.cont [11/16] 0.0, 128
    %268 = vxpose.xlu0.b32.cont [12/16] 0.0, 128
    %269 = vxpose.xlu0.b32.cont [13/16] 0.0, 128
    %270 = vxpose.xlu0.b32.cont [14/16] 0.0, 128
    %271 = vxpose.xlu0.b32.cont [15/16] 0.0, 128
    %272 = vxpose.xlu0.b32.end [16/16] 0.0, 128
    %v273 = vpop.trf.xlu0
    %v274 = vpop.trf.xlu0
    %v275 = vpop.trf.xlu0
    %v276 = vpop.trf.xlu0
    %v277 = vpop.trf.xlu0
    %v278 = vpop.trf.xlu0
    %v279 = vpop.trf.xlu0
    %v280 = vpop.trf.xlu0
    %v281 = vpop.trf.xlu0
    %v282 = vpop.trf.xlu0
    %v283 = vpop.trf.xlu0
    %v284 = vpop.trf.xlu0
    %v285 = vpop.trf.xlu0
    %v286 = vpop.trf.xlu0
    %v287 = vpop.trf.xlu0
    %v288 = vpop.trf.xlu0
    %289 = vset.pattern.permute.xlu0 0
    %290 = vperm.xlu0 %289, %v243
    %v291 = vpop.permute.xlu0 %290
    %293 = vset.pattern.permute.xlu0 0
    %294 = vperm.xlu0 %293, %v246
    %v295 = vpop.permute.xlu0 %294
    %v297 = vlaneseq
    %v298 = vshrl.u32 %v297, 7
    %v299 = vsub.s32 0, %v298
    %v300 = vrot.slane %v273, %v299
    %v301 = vadd.f32 %v291, %v300
    %v302 = vadd.f32 %v295, %v300
    %vm303 = vcmp.ge.f32.partialorder %v301, 0.0
    %vm304 = vcmp.ge.f32.partialorder %v302, 0.0
    %v305 = vmul.f32 %v301, 0.2
    %v306 = vmul.f32 %v302, 0.2
    %v307 = vsel %vm303, %v301, %v305
    %v308 = vsel %vm304, %v302, %v306
    %v309 = vadd.f32 %v307, %v47
    %v310 = vadd.f32 %v308, %v48
    %vm311 = vcmask 130048
    %v312 = vsel %vm311, %v309, -inf
    %313 = vmax.xlane.f32.xlu0 %v312
    %v314 = vpop.xlane.xlu0 %313
    %v315 = vsel %vm311, %v310, -inf
    %316 = vmax.xlane.f32.xlu0 %v315
    %v317 = vpop.xlane.xlu0 %316
    %v318 = vsub.f32 %v309, %v314
    %v319 = vsub.f32 %v310, %v317
    %v320 = vmul.f32 %v318, 1.442695
    %v321 = vpow.pop %v320
    %v322 = vmul.f32 %v319, 1.442695
    %v323 = vpow.pop %v322
    %v324 = vsel %vm311, %v321, 0.0
    %325 = vadd.xlane.f32.xlu0 %v324
    %v326 = vpop.xlane.xlu0 %325
    %v327 = vsel %vm311, %v323, 0.0
    %328 = vadd.xlane.f32.xlu0 %v327
    %v329 = vpop.xlane.xlu0 %328
    %v330 = vmax.f32 %v326, 1e-20
    %v331 = vmax.f32 %v329, 1e-20
    %v332 = vrcp.pop %v330
    %v333 = vrcp.pop %v331
    %v334 = vmul.f32 %v321, %v332
    %v335 = vmul.f32 %v323, %v333
    %v336 = vpack.c.bf16 %v335, %v334
    %v338 = vsel %vm311, %v336, 0
    %340 = vmatprep.subr.bf16.mxu0 0
    %341 = vmatpush1.bf16.msra.mxu0 0
    %342 = vmatprep.subr.bf16.mxu0 0
    %343 = vmatpush1.bf16.msra.mxu0 0
    %344 = vmatprep.subr.bf16.mxu0 0
    %345 = vmatpush1.bf16.msra.mxu0 0
    %346 = vmatprep.subr.bf16.mxu0 0
    %347 = vmatpush1.bf16.msra.mxu0 0
    %348 = vmatprep.subr.bf16.mxu0 0
    %349 = vmatpush1.bf16.msra.mxu0 0
    %350 = vmatprep.subr.bf16.mxu0 0
    %351 = vmatpush1.bf16.msra.mxu0 0
    %352 = vmatprep.subr.bf16.mxu0 0
    %353 = vmatpush1.bf16.msra.mxu0 0
    %354 = vmatprep.subr.bf16.mxu0 0
    %355 = vmatpush1.bf16.msra.mxu0 %v126
    %356 = vmatprep.subr.bf16.mxu0 0
    %357 = vmatpush2.bf16.msra.mxu0 0
    %358 = vmatprep.subr.bf16.mxu0 0
    %359 = vmatpush2.bf16.msra.mxu0 0
    %360 = vmatprep.subr.bf16.mxu0 0
    %361 = vmatpush2.bf16.msra.mxu0 0
    %362 = vmatprep.subr.bf16.mxu0 0
    %363 = vmatpush2.bf16.msra.mxu0 0
    %364 = vmatprep.subr.bf16.mxu0 0
    %365 = vmatpush2.bf16.msra.mxu0 0
    %366 = vmatprep.subr.bf16.mxu0 0
    %367 = vmatpush2.bf16.msra.mxu0 0
    %368 = vmatprep.subr.bf16.mxu0 0
    %369 = vmatpush2.bf16.msra.mxu0 0
    %370 = vmatprep.subr.bf16.mxu0 0
    %371 = vmatpush2.bf16.msra.mxu0 0
    %372 = vmatprep.mubr.bf16.mxu0 0
    %373 = vmatmul.mubr.bf16.gmra.mxu0 %v338
    %v374 = vpop.f32.mrf.mxu0
    %v375 = vadd.f32 0.0, %v374
    %v376 = vpop.f32.mrf.mxu0
    %v377 = vpop.f32.mrf.mxu0
    %v378 = vadd.f32 0.0, %v377
    %v379 = vpop.f32.mrf.mxu0
    %380 = vdwg.mxu0
    %381 = vset.pattern.permute.xlu0 1
    %382 = vperm.xlu0 %381, %v243
    %v383 = vpop.permute.xlu0 %382
    %385 = vset.pattern.permute.xlu0 1
    %386 = vperm.xlu0 %385, %v246
    %v387 = vpop.permute.xlu0 %386
    %v389 = vlaneseq
    %v390 = vshrl.u32 %v389, 7
    %v391 = vsub.s32 1, %v390
    %v392 = vrot.slane %v273, %v391
    %v393 = vadd.f32 %v383, %v392
    %v394 = vadd.f32 %v387, %v392
    %vm395 = vcmp.ge.f32.partialorder %v393, 0.0
    %vm396 = vcmp.ge.f32.partialorder %v394, 0.0
    %v397 = vmul.f32 %v393, 0.2
    %v398 = vmul.f32 %v394, 0.2
    %v399 = vsel %vm395, %v393, %v397
    %v400 = vsel %vm396, %v394, %v398
    %v401 = vadd.f32 %v399, %v47
    %v402 = vadd.f32 %v400, %v48
    %v403 = vsel %vm311, %v401, -inf
    %404 = vmax.xlane.f32.xlu0 %v403
    %v405 = vpop.xlane.xlu0 %404
    %v406 = vsel %vm311, %v402, -inf
    %407 = vmax.xlane.f32.xlu0 %v406
    %v408 = vpop.xlane.xlu0 %407
    %v409 = vsub.f32 %v401, %v405
    %v410 = vsub.f32 %v402, %v408
    %v411 = vmul.f32 %v409, 1.442695
    %v412 = vpow.pop %v411
    %v413 = vmul.f32 %v410, 1.442695
    %v414 = vpow.pop %v413
    %v415 = vsel %vm311, %v412, 0.0
    %416 = vadd.xlane.f32.xlu0 %v415
    %v417 = vpop.xlane.xlu0 %416
    %v418 = vsel %vm311, %v414, 0.0
    %419 = vadd.xlane.f32.xlu0 %v418
    %v420 = vpop.xlane.xlu0 %419
    %v421 = vmax.f32 %v417, 1e-20
    %v422 = vmax.f32 %v420, 1e-20
    %v423 = vrcp.pop %v421
    %v424 = vrcp.pop %v422
    %v425 = vmul.f32 %v412, %v423
    %v426 = vmul.f32 %v414, %v424
    %v427 = vpack.c.bf16 %v426, %v425
    %429 = vrot.lane.b32.xlu0 %v126, 112
    %v430 = vpop.permute.xlu0 %429
    %v433 = vsel %vm311, %v427, 0
    %435 = vmatprep.subr.bf16.mxu0 0
    %436 = vmatpush1.bf16.msra.mxu0 0
    %437 = vmatprep.subr.bf16.mxu0 0
    %438 = vmatpush1.bf16.msra.mxu0 0
    %439 = vmatprep.subr.bf16.mxu0 0
    %440 = vmatpush1.bf16.msra.mxu0 0
    %441 = vmatprep.subr.bf16.mxu0 0
    %442 = vmatpush1.bf16.msra.mxu0 0
    %443 = vmatprep.subr.bf16.mxu0 0
    %444 = vmatpush1.bf16.msra.mxu0 0
    %445 = vmatprep.subr.bf16.mxu0 0
    %446 = vmatpush1.bf16.msra.mxu0 0
    %447 = vmatprep.subr.bf16.mxu0 0
    %448 = vmatpush1.bf16.msra.mxu0 0
    %449 = vmatprep.subr.bf16.mxu0 0
    %450 = vmatpush1.bf16.msra.mxu0 %v430
    %451 = vmatprep.subr.bf16.mxu0 0
    %452 = vmatpush2.bf16.msra.mxu0 0
    %453 = vmatprep.subr.bf16.mxu0 0
    %454 = vmatpush2.bf16.msra.mxu0 0
    %455 = vmatprep.subr.bf16.mxu0 0
    %456 = vmatpush2.bf16.msra.mxu0 0
    %457 = vmatprep.subr.bf16.mxu0 0
    %458 = vmatpush2.bf16.msra.mxu0 0
    %459 = vmatprep.subr.bf16.mxu0 0
    %460 = vmatpush2.bf16.msra.mxu0 0
    %461 = vmatprep.subr.bf16.mxu0 0
    %462 = vmatpush2.bf16.msra.mxu0 0
    %463 = vmatprep.subr.bf16.mxu0 0
    %464 = vmatpush2.bf16.msra.mxu0 0
    %465 = vmatprep.subr.bf16.mxu0 0
    %466 = vmatpush2.bf16.msra.mxu0 0
    %467 = vmatprep.mubr.bf16.mxu0 0
    %468 = vmatmul.mubr.bf16.gmra.mxu0 %v433
    %v469 = vpop.f32.mrf.mxu0
    %v470 = vadd.f32 0.0, %v469
    %v471 = vpop.f32.mrf.mxu0
    %v472 = vpop.f32.mrf.mxu0
    %v473 = vadd.f32 0.0, %v472
    %v474 = vpop.f32.mrf.mxu0
    %475 = vdwg.mxu0
    %476 = vset.pattern.permute.xlu0 2
    %477 = vperm.xlu0 %476, %v243
    %v478 = vpop.permute.xlu0 %477
    %480 = vset.pattern.permute.xlu0 2
    %481 = vperm.xlu0 %480, %v246
    %v482 = vpop.permute.xlu0 %481
    %v484 = vlaneseq
    %v485 = vshrl.u32 %v484, 7
    %v486 = vsub.s32 2, %v485
    %v487 = vrot.slane %v273, %v486
    %v488 = vadd.f32 %v478, %v487
    %v489 = vadd.f32 %v482, %v487
    %vm490 = vcmp.ge.f32.partialorder %v488, 0.0
    %vm491 = vcmp.ge.f32.partialorder %v489, 0.0
    %v492 = vmul.f32 %v488, 0.2
    %v493 = vmul.f32 %v489, 0.2
    %v494 = vsel %vm490, %v488, %v492
    %v495 = vsel %vm491, %v489, %v493
    %v496 = vadd.f32 %v494, %v47
    %v497 = vadd.f32 %v495, %v48
    %v498 = vsel %vm311, %v496, -inf
    %499 = vmax.xlane.f32.xlu0 %v498
    %v500 = vpop.xlane.xlu0 %499
    %v501 = vsel %vm311, %v497, -inf
    %502 = vmax.xlane.f32.xlu0 %v501
    %v503 = vpop.xlane.xlu0 %502
    %v504 = vsub.f32 %v496, %v500
    %v505 = vsub.f32 %v497, %v503
    %v506 = vmul.f32 %v504, 1.442695
    %v507 = vpow.pop %v506
    %v508 = vmul.f32 %v505, 1.442695
    %v509 = vpow.pop %v508
    %v510 = vsel %vm311, %v507, 0.0
    %511 = vadd.xlane.f32.xlu0 %v510
    %v512 = vpop.xlane.xlu0 %511
    %v513 = vsel %vm311, %v509, 0.0
    %514 = vadd.xlane.f32.xlu0 %v513
    %v515 = vpop.xlane.xlu0 %514
    %v516 = vmax.f32 %v512, 1e-20
    %v517 = vmax.f32 %v515, 1e-20
    %v518 = vrcp.pop %v516
    %v519 = vrcp.pop %v517
    %v520 = vmul.f32 %v507, %v518
    %v521 = vmul.f32 %v509, %v519
    %v522 = vpack.c.bf16 %v521, %v520
    %523 = vrot.lane.b32.xlu0 %v126, 96
    %v524 = vpop.permute.xlu0 %523
    %v527 = vsel %vm311, %v522, 0
    %529 = vmatprep.subr.bf16.mxu0 0
    %530 = vmatpush1.bf16.msra.mxu0 0
    %531 = vmatprep.subr.bf16.mxu0 0
    %532 = vmatpush1.bf16.msra.mxu0 0
    %533 = vmatprep.subr.bf16.mxu0 0
    %534 = vmatpush1.bf16.msra.mxu0 0
    %535 = vmatprep.subr.bf16.mxu0 0
    %536 = vmatpush1.bf16.msra.mxu0 0
    %537 = vmatprep.subr.bf16.mxu0 0
    %538 = vmatpush1.bf16.msra.mxu0 0
    %539 = vmatprep.subr.bf16.mxu0 0
    %540 = vmatpush1.bf16.msra.mxu0 0
    %541 = vmatprep.subr.bf16.mxu0 0
    %542 = vmatpush1.bf16.msra.mxu0 0
    %543 = vmatprep.subr.bf16.mxu0 0
    %544 = vmatpush1.bf16.msra.mxu0 %v524
    %545 = vmatprep.subr.bf16.mxu0 0
    %546 = vmatpush2.bf16.msra.mxu0 0
    %547 = vmatprep.subr.bf16.mxu0 0
    %548 = vmatpush2.bf16.msra.mxu0 0
    %549 = vmatprep.subr.bf16.mxu0 0
    %550 = vmatpush2.bf16.msra.mxu0 0
    %551 = vmatprep.subr.bf16.mxu0 0
    %552 = vmatpush2.bf16.msra.mxu0 0
    %553 = vmatprep.subr.bf16.mxu0 0
    %554 = vmatpush2.bf16.msra.mxu0 0
    %555 = vmatprep.subr.bf16.mxu0 0
    %556 = vmatpush2.bf16.msra.mxu0 0
    %557 = vmatprep.subr.bf16.mxu0 0
    %558 = vmatpush2.bf16.msra.mxu0 0
    %559 = vmatprep.subr.bf16.mxu0 0
    %560 = vmatpush2.bf16.msra.mxu0 0
    %561 = vmatprep.mubr.bf16.mxu0 0
    %562 = vmatmul.mubr.bf16.gmra.mxu0 %v527
    %v563 = vpop.f32.mrf.mxu0
    %v564 = vadd.f32 0.0, %v563
    %v565 = vpop.f32.mrf.mxu0
    %v566 = vpop.f32.mrf.mxu0
    %v567 = vadd.f32 0.0, %v566
    %v568 = vpop.f32.mrf.mxu0
    %569 = vdwg.mxu0
    %570 = vset.pattern.permute.xlu0 3
    %571 = vperm.xlu0 %570, %v243
    %v572 = vpop.permute.xlu0 %571
    %574 = vset.pattern.permute.xlu0 3
    %575 = vperm.xlu0 %574, %v246
    %v576 = vpop.permute.xlu0 %575
    %v578 = vlaneseq
    %v579 = vshrl.u32 %v578, 7
    %v580 = vsub.s32 3, %v579
    %v581 = vrot.slane %v273, %v580
    %v582 = vadd.f32 %v572, %v581
    %v583 = vadd.f32 %v576, %v581
    %vm584 = vcmp.ge.f32.partialorder %v582, 0.0
    %vm585 = vcmp.ge.f32.partialorder %v583, 0.0
    %v586 = vmul.f32 %v582, 0.2
    %v587 = vmul.f32 %v583, 0.2
    %v588 = vsel %vm584, %v582, %v586
    %v589 = vsel %vm585, %v583, %v587
    %v590 = vadd.f32 %v588, %v47
    %v591 = vadd.f32 %v589, %v48
    %v592 = vsel %vm311, %v590, -inf
    %593 = vmax.xlane.f32.xlu0 %v592
    %v594 = vpop.xlane.xlu0 %593
    %v595 = vsel %vm311, %v591, -inf
    %596 = vmax.xlane.f32.xlu0 %v595
    %v597 = vpop.xlane.xlu0 %596
    %v598 = vsub.f32 %v590, %v594
    %v599 = vsub.f32 %v591, %v597
    %v600 = vmul.f32 %v598, 1.442695
    %v601 = vpow.pop %v600
    %v602 = vmul.f32 %v599, 1.442695
    %v603 = vpow.pop %v602
    %v604 = vsel %vm311, %v601, 0.0
    %605 = vadd.xlane.f32.xlu0 %v604
    %v606 = vpop.xlane.xlu0 %605
    %v607 = vsel %vm311, %v603, 0.0
    %608 = vadd.xlane.f32.xlu0 %v607
    %v609 = vpop.xlane.xlu0 %608
    %v610 = vmax.f32 %v606, 1e-20
    %v611 = vmax.f32 %v609, 1e-20
    %v612 = vrcp.pop %v610
    %v613 = vrcp.pop %v611
    %v614 = vmul.f32 %v601, %v612
    %v615 = vmul.f32 %v603, %v613
    %v616 = vpack.c.bf16 %v615, %v614
    %617 = vrot.lane.b32.xlu0 %v126, 80
    %v618 = vpop.permute.xlu0 %617
    %v621 = vsel %vm311, %v616, 0
    %623 = vmatprep.subr.bf16.mxu0 0
    %624 = vmatpush1.bf16.msra.mxu0 0
    %625 = vmatprep.subr.bf16.mxu0 0
    %626 = vmatpush1.bf16.msra.mxu0 0
    %627 = vmatprep.subr.bf16.mxu0 0
    %628 = vmatpush1.bf16.msra.mxu0 0
    %629 = vmatprep.subr.bf16.mxu0 0
    %630 = vmatpush1.bf16.msra.mxu0 0
    %631 = vmatprep.subr.bf16.mxu0 0
    %632 = vmatpush1.bf16.msra.mxu0 0
    %633 = vmatprep.subr.bf16.mxu0 0
    %634 = vmatpush1.bf16.msra.mxu0 0
    %635 = vmatprep.subr.bf16.mxu0 0
    %636 = vmatpush1.bf16.msra.mxu0 0
    %637 = vmatprep.subr.bf16.mxu0 0
    %638 = vmatpush1.bf16.msra.mxu0 %v618
    %639 = vmatprep.subr.bf16.mxu0 0
    %640 = vmatpush2.bf16.msra.mxu0 0
    %641 = vmatprep.subr.bf16.mxu0 0
    %642 = vmatpush2.bf16.msra.mxu0 0
    %643 = vmatprep.subr.bf16.mxu0 0
    %644 = vmatpush2.bf16.msra.mxu0 0
    %645 = vmatprep.subr.bf16.mxu0 0
    %646 = vmatpush2.bf16.msra.mxu0 0
    %647 = vmatprep.subr.bf16.mxu0 0
    %648 = vmatpush2.bf16.msra.mxu0 0
    %649 = vmatprep.subr.bf16.mxu0 0
    %650 = vmatpush2.bf16.msra.mxu0 0
    %651 = vmatprep.subr.bf16.mxu0 0
    %652 = vmatpush2.bf16.msra.mxu0 0
    %653 = vmatprep.subr.bf16.mxu0 0
    %654 = vmatpush2.bf16.msra.mxu0 0
    %655 = vmatprep.mubr.bf16.mxu0 0
    %656 = vmatmul.mubr.bf16.gmra.mxu0 %v621
    %v657 = vpop.f32.mrf.mxu0
    %v658 = vadd.f32 0.0, %v657
    %v659 = vpop.f32.mrf.mxu0
    %v660 = vpop.f32.mrf.mxu0
    %v661 = vadd.f32 0.0, %v660
    %v662 = vpop.f32.mrf.mxu0
    %663 = vdwg.mxu0
    %666 = vrot.lane.b32.xlu0 %v470, 16
    %v667 = vpop.permute.xlu0 %666
    %668 = vrot.lane.b32.xlu0 %v473, 16
    %v669 = vpop.permute.xlu0 %668
    %674 = vrot.lane.b32.xlu0 %v564, 32
    %v675 = vpop.permute.xlu0 %674
    %676 = vrot.lane.b32.xlu0 %v567, 32
    %v677 = vpop.permute.xlu0 %676
    %682 = vrot.lane.b32.xlu0 %v658, 48
    %v683 = vpop.permute.xlu0 %682
    %684 = vrot.lane.b32.xlu0 %v661, 48
    %v685 = vpop.permute.xlu0 %684
    %v688 = vsel %vm311, %v375, %v667
    %v689 = vsel %vm311, %v378, %v669
    %v690 = vsel %vm81, %v688, %v675
    %v691 = vsel %vm81, %v689, %v677
    %vm692 = vcmask 392192
    %v693 = vsel %vm692, %v690, %v683
    %v694 = vsel %vm692, %v691, %v685
    %v695 = vadd.f32 %v693, %v174
    %v696 = vadd.f32 %v694, %v177
    %v698 = vlaneseq
    %v699 = vshrl.u32 %v698, 7
    %v700 = vsub.s32 0, %v699
    %v701 = vrot.slane %v67, %v700
    %v703 = vadd.f32 %v695, %v701
    %v704 = vadd.f32 %v696, %v701
    %vm705 = vcmp.gt.f32.partialorder %v703, 0.0
    %vm706 = vcmp.gt.f32.partialorder %v704, 0.0
    %v707 = vmul.f32 %v703, 1.442695
    %v708 = vpow.pop %v707
    %v709 = vmul.f32 %v704, 1.442695
    %v710 = vpow.pop %v709
    %v711 = vsub.f32 %v708, 1.0
    %v712 = vsub.f32 %v710, 1.0
    %v713 = vsel %vm705, %v703, %v711
    %v714 = vsel %vm706, %v704, %v712
    %v715 = vld [vmem:[%s7] sm:$0xf]
    %v716 = vld [vmem:[%s7 + $0x4] sm:$0xf]
    %v717 = vld [vmem:[%s7 + $0x8] sm:$0xf]
    %v718 = vld [vmem:[%s7 + $0xc] sm:$0xf]
    %v719 = vld [vmem:[%s7 + $0x10] sm:$0xf]
    %v720 = vld [vmem:[%s7 + $0x14] sm:$0xf]
    %v721 = vld [vmem:[%s7 + $0x18] sm:$0xf]
    %v722 = vld [vmem:[%s7 + $0x1c] sm:$0xf]
    %v723 = vld [vmem:[%s8] sm:$0xf]
    %v724 = vld [vmem:[%s8 + $0x4] sm:$0xf]
    %v725 = vld [vmem:[%s8 + $0x8] sm:$0xf]
    %v726 = vld [vmem:[%s8 + $0xc] sm:$0xf]
    %v727 = vld [vmem:[%s8 + $0x10] sm:$0xf]
    %v728 = vld [vmem:[%s8 + $0x14] sm:$0xf]
    %v729 = vld [vmem:[%s8 + $0x18] sm:$0xf]
    %v730 = vld [vmem:[%s8 + $0x1c] sm:$0xf]
    %v731 = vld [vmem:[%s9] sm:$0x1]
    %v732 = vpack.c.bf16 %v714, %v713
    %v741 = vunpack.c.l.b16 %v715
    %v742 = vunpack.c.l.b16 %v716
    %v743 = vunpack.c.l.b16 %v717
    %v744 = vunpack.c.l.b16 %v718
    %v745 = vunpack.c.l.b16 %v719
    %v746 = vunpack.c.l.b16 %v720
    %v747 = vunpack.c.l.b16 %v721
    %v748 = vunpack.c.l.b16 %v722
    %v749 = vpack.c.b16 %v742, %v741
    %v750 = vpack.c.b16 %v744, %v743
    %v751 = vpack.c.b16 %v746, %v745
    %v752 = vpack.c.b16 %v748, %v747
    %v758 = vsel %vm204, %v732, 0
    %760 = vmatprep.subr.bf16.mxu0 0
    %761 = vmatpush1.bf16.msra.mxu0 0
    %762 = vmatprep.subr.bf16.mxu0 0
    %763 = vmatpush1.bf16.msra.mxu0 0
    %764 = vmatprep.subr.bf16.mxu0 0
    %765 = vmatpush1.bf16.msra.mxu0 0
    %766 = vmatprep.subr.bf16.mxu0 0
    %767 = vmatpush1.bf16.msra.mxu0 0
    %768 = vmatprep.subr.bf16.mxu0 0
    %769 = vmatpush1.bf16.msra.mxu0 %v752
    %770 = vmatprep.subr.bf16.mxu0 0
    %771 = vmatpush1.bf16.msra.mxu0 %v751
    %772 = vmatprep.subr.bf16.mxu0 0
    %773 = vmatpush1.bf16.msra.mxu0 %v750
    %774 = vmatprep.subr.bf16.mxu0 0
    %775 = vmatpush1.bf16.msra.mxu0 %v749
    %776 = vmatprep.subr.bf16.mxu0 0
    %777 = vmatpush2.bf16.msra.mxu0 0
    %778 = vmatprep.subr.bf16.mxu0 0
    %779 = vmatpush2.bf16.msra.mxu0 0
    %780 = vmatprep.subr.bf16.mxu0 0
    %781 = vmatpush2.bf16.msra.mxu0 0
    %782 = vmatprep.subr.bf16.mxu0 0
    %783 = vmatpush2.bf16.msra.mxu0 0
    %784 = vmatprep.subr.bf16.mxu0 0
    %785 = vmatpush2.bf16.msra.mxu0 0
    %786 = vmatprep.subr.bf16.mxu0 0
    %787 = vmatpush2.bf16.msra.mxu0 0
    %788 = vmatprep.subr.bf16.mxu0 0
    %789 = vmatpush2.bf16.msra.mxu0 0
    %790 = vmatprep.subr.bf16.mxu0 0
    %791 = vmatpush2.bf16.msra.mxu0 0
    %792 = vmatprep.mubr.bf16.mxu0 0
    %793 = vmatmul.mubr.bf16.gmra.mxu0 %v758
    %v794 = vpop.f32.mrf.mxu0
    %v795 = vadd.f32 0.0, %v794
    %v796 = vpop.f32.mrf.mxu0
    %v797 = vpop.f32.mrf.mxu0
    %v798 = vadd.f32 0.0, %v797
    %v799 = vpop.f32.mrf.mxu0
    %800 = vdwg.mxu0
    %v801 = vpack.c.bf16 %v798, %v795
    %v810 = vunpack.c.l.b16 %v723
    %v811 = vunpack.c.l.b16 %v724
    %v812 = vunpack.c.l.b16 %v725
    %v813 = vunpack.c.l.b16 %v726
    %v814 = vunpack.c.l.b16 %v727
    %v815 = vunpack.c.l.b16 %v728
    %v816 = vunpack.c.l.b16 %v729
    %v817 = vunpack.c.l.b16 %v730
    %v818 = vpack.c.b16 %v811, %v810
    %v819 = vpack.c.b16 %v813, %v812
    %v820 = vpack.c.b16 %v815, %v814
    %v821 = vpack.c.b16 %v817, %v816
    %v827 = vsel %vm204, %v801, 0
    %829 = vmatprep.subr.bf16.mxu0 0
    %830 = vmatpush1.bf16.msra.mxu0 0
    %831 = vmatprep.subr.bf16.mxu0 0
    %832 = vmatpush1.bf16.msra.mxu0 0
    %833 = vmatprep.subr.bf16.mxu0 0
    %834 = vmatpush1.bf16.msra.mxu0 0
    %835 = vmatprep.subr.bf16.mxu0 0
    %836 = vmatpush1.bf16.msra.mxu0 0
    %837 = vmatprep.subr.bf16.mxu0 0
    %838 = vmatpush1.bf16.msra.mxu0 %v821
    %839 = vmatprep.subr.bf16.mxu0 0
    %840 = vmatpush1.bf16.msra.mxu0 %v820
    %841 = vmatprep.subr.bf16.mxu0 0
    %842 = vmatpush1.bf16.msra.mxu0 %v819
    %843 = vmatprep.subr.bf16.mxu0 0
    %844 = vmatpush1.bf16.msra.mxu0 %v818
    %845 = vmatprep.subr.bf16.mxu0 0
    %846 = vmatpush2.bf16.msra.mxu0 0
    %847 = vmatprep.subr.bf16.mxu0 0
    %848 = vmatpush2.bf16.msra.mxu0 0
    %849 = vmatprep.subr.bf16.mxu0 0
    %850 = vmatpush2.bf16.msra.mxu0 0
    %851 = vmatprep.subr.bf16.mxu0 0
    %852 = vmatpush2.bf16.msra.mxu0 0
    %853 = vmatprep.subr.bf16.mxu0 0
    %854 = vmatpush2.bf16.msra.mxu0 0
    %855 = vmatprep.subr.bf16.mxu0 0
    %856 = vmatpush2.bf16.msra.mxu0 0
    %857 = vmatprep.subr.bf16.mxu0 0
    %858 = vmatpush2.bf16.msra.mxu0 0
    %859 = vmatprep.subr.bf16.mxu0 0
    %860 = vmatpush2.bf16.msra.mxu0 0
    %861 = vmatprep.mubr.bf16.mxu0 0
    %862 = vmatmul.mubr.bf16.gmra.mxu0 %v827
    %v863 = vpop.f32.mrf.mxu0
    %v864 = vadd.f32 0.0, %v863
    %v865 = vpop.f32.mrf.mxu0
    %v866 = vpop.f32.mrf.mxu0
    %v867 = vadd.f32 0.0, %v866
    %v868 = vpop.f32.mrf.mxu0
    %869 = vdwg.mxu0
    %872 = vrot.lane.b32.xlu0 %v864, 124
    %v873 = vpop.permute.xlu0 %872
    %874 = vrot.lane.b32.xlu0 %v867, 124
    %v875 = vpop.permute.xlu0 %874
    %878 = vxpose.xlu0.b32.start [1/16] %v873, 128
    %879 = vxpose.xlu0.b32.cont [2/16] %v875, 128
    %880 = vxpose.xlu0.b32.cont [3/16] 0.0, 128
    %881 = vxpose.xlu0.b32.cont [4/16] 0.0, 128
    %882 = vxpose.xlu0.b32.cont [5/16] 0.0, 128
    %883 = vxpose.xlu0.b32.cont [6/16] 0.0, 128
    %884 = vxpose.xlu0.b32.cont [7/16] 0.0, 128
    %885 = vxpose.xlu0.b32.cont [8/16] 0.0, 128
    %886 = vxpose.xlu0.b32.cont [9/16] 0.0, 128
    %887 = vxpose.xlu0.b32.cont [10/16] 0.0, 128
    %888 = vxpose.xlu0.b32.cont [11/16] 0.0, 128
    %889 = vxpose.xlu0.b32.cont [12/16] 0.0, 128
    %890 = vxpose.xlu0.b32.cont [13/16] 0.0, 128
    %891 = vxpose.xlu0.b32.cont [14/16] 0.0, 128
    %892 = vxpose.xlu0.b32.cont [15/16] 0.0, 128
    %893 = vxpose.xlu0.b32.end [16/16] 0.0, 128
    %v894 = vpop.trf.xlu0
    %v895 = vpop.trf.xlu0
    %v896 = vpop.trf.xlu0
    %v897 = vpop.trf.xlu0
    %v898 = vpop.trf.xlu0
    %v899 = vpop.trf.xlu0
    %v900 = vpop.trf.xlu0
    %v901 = vpop.trf.xlu0
    %v902 = vpop.trf.xlu0
    %v903 = vpop.trf.xlu0
    %v904 = vpop.trf.xlu0
    %v905 = vpop.trf.xlu0
    %v906 = vpop.trf.xlu0
    %v907 = vpop.trf.xlu0
    %v908 = vpop.trf.xlu0
    %v909 = vpop.trf.xlu0
    %910 = vset.pattern.permute.xlu0 0
    %911 = vperm.xlu0 %910, %v864
    %v912 = vpop.permute.xlu0 %911
    %914 = vset.pattern.permute.xlu0 0
    %915 = vperm.xlu0 %914, %v867
    %v916 = vpop.permute.xlu0 %915
    %v918 = vlaneseq
    %v919 = vshrl.u32 %v918, 7
    %v920 = vsub.s32 0, %v919
    %v921 = vrot.slane %v894, %v920
    %v922 = vadd.f32 %v912, %v921
    %v923 = vadd.f32 %v916, %v921
    %vm924 = vcmp.ge.f32.partialorder %v922, 0.0
    %vm925 = vcmp.ge.f32.partialorder %v923, 0.0
    %v926 = vmul.f32 %v922, 0.2
    %v927 = vmul.f32 %v923, 0.2
    %v928 = vsel %vm924, %v922, %v926
    %v929 = vsel %vm925, %v923, %v927
    %v930 = vadd.f32 %v928, %v47
    %v931 = vadd.f32 %v929, %v48
    %v932 = vsel %vm311, %v930, -inf
    %933 = vmax.xlane.f32.xlu0 %v932
    %v934 = vpop.xlane.xlu0 %933
    %v935 = vsel %vm311, %v931, -inf
    %936 = vmax.xlane.f32.xlu0 %v935
    %v937 = vpop.xlane.xlu0 %936
    %v938 = vsub.f32 %v930, %v934
    %v939 = vsub.f32 %v931, %v937
    %v940 = vmul.f32 %v938, 1.442695
    %v941 = vpow.pop %v940
    %v942 = vmul.f32 %v939, 1.442695
    %v943 = vpow.pop %v942
    %v944 = vsel %vm311, %v941, 0.0
    %945 = vadd.xlane.f32.xlu0 %v944
    %v946 = vpop.xlane.xlu0 %945
    %v947 = vsel %vm311, %v943, 0.0
    %948 = vadd.xlane.f32.xlu0 %v947
    %v949 = vpop.xlane.xlu0 %948
    %v950 = vmax.f32 %v946, 1e-20
    %v951 = vmax.f32 %v949, 1e-20
    %v952 = vrcp.pop %v950
    %v953 = vrcp.pop %v951
    %v954 = vmul.f32 %v941, %v952
    %v955 = vmul.f32 %v943, %v953
    %v956 = vpack.c.bf16 %v955, %v954
    %957 = vset.pattern.permute.xlu0 1
    %958 = vperm.xlu0 %957, %v864
    %v959 = vpop.permute.xlu0 %958
    %961 = vset.pattern.permute.xlu0 1
    %962 = vperm.xlu0 %961, %v867
    %v963 = vpop.permute.xlu0 %962
    %v965 = vlaneseq
    %v966 = vshrl.u32 %v965, 7
    %v967 = vsub.s32 1, %v966
    %v968 = vrot.slane %v894, %v967
    %v969 = vadd.f32 %v959, %v968
    %v970 = vadd.f32 %v963, %v968
    %vm971 = vcmp.ge.f32.partialorder %v969, 0.0
    %vm972 = vcmp.ge.f32.partialorder %v970, 0.0
    %v973 = vmul.f32 %v969, 0.2
    %v974 = vmul.f32 %v970, 0.2
    %v975 = vsel %vm971, %v969, %v973
    %v976 = vsel %vm972, %v970, %v974
    %v977 = vadd.f32 %v975, %v47
    %v978 = vadd.f32 %v976, %v48
    %v979 = vsel %vm311, %v977, -inf
    %980 = vmax.xlane.f32.xlu0 %v979
    %v981 = vpop.xlane.xlu0 %980
    %v982 = vsel %vm311, %v978, -inf
    %983 = vmax.xlane.f32.xlu0 %v982
    %v984 = vpop.xlane.xlu0 %983
    %v985 = vsub.f32 %v977, %v981
    %v986 = vsub.f32 %v978, %v984
    %v987 = vmul.f32 %v985, 1.442695
    %v988 = vpow.pop %v987
    %v989 = vmul.f32 %v986, 1.442695
    %v990 = vpow.pop %v989
    %v991 = vsel %vm311, %v988, 0.0
    %992 = vadd.xlane.f32.xlu0 %v991
    %v993 = vpop.xlane.xlu0 %992
    %v994 = vsel %vm311, %v990, 0.0
    %995 = vadd.xlane.f32.xlu0 %v994
    %v996 = vpop.xlane.xlu0 %995
    %v997 = vmax.f32 %v993, 1e-20
    %v998 = vmax.f32 %v996, 1e-20
    %v999 = vrcp.pop %v997
    %v1000 = vrcp.pop %v998
    %v1001 = vmul.f32 %v988, %v999
    %v1002 = vmul.f32 %v990, %v1000
    %v1003 = vpack.c.bf16 %v1002, %v1001
    %1005 = vrot.lane.b32.xlu0 %v801, 112
    %v1006 = vpop.permute.xlu0 %1005
    %v1009 = vsel %vm311, %v1003, 0
    %1011 = vmatprep.subr.bf16.mxu0 0
    %1012 = vmatpush1.bf16.msra.mxu0 0
    %1013 = vmatprep.subr.bf16.mxu0 0
    %1014 = vmatpush1.bf16.msra.mxu0 0
    %1015 = vmatprep.subr.bf16.mxu0 0
    %1016 = vmatpush1.bf16.msra.mxu0 0
    %1017 = vmatprep.subr.bf16.mxu0 0
    %1018 = vmatpush1.bf16.msra.mxu0 0
    %1019 = vmatprep.subr.bf16.mxu0 0
    %1020 = vmatpush1.bf16.msra.mxu0 0
    %1021 = vmatprep.subr.bf16.mxu0 0
    %1022 = vmatpush1.bf16.msra.mxu0 0
    %1023 = vmatprep.subr.bf16.mxu0 0
    %1024 = vmatpush1.bf16.msra.mxu0 0
    %1025 = vmatprep.subr.bf16.mxu0 0
    %1026 = vmatpush1.bf16.msra.mxu0 %v1006
    %1027 = vmatprep.subr.bf16.mxu0 0
    %1028 = vmatpush2.bf16.msra.mxu0 0
    %1029 = vmatprep.subr.bf16.mxu0 0
    %1030 = vmatpush2.bf16.msra.mxu0 0
    %1031 = vmatprep.subr.bf16.mxu0 0
    %1032 = vmatpush2.bf16.msra.mxu0 0
    %1033 = vmatprep.subr.bf16.mxu0 0
    %1034 = vmatpush2.bf16.msra.mxu0 0
    %1035 = vmatprep.subr.bf16.mxu0 0
    %1036 = vmatpush2.bf16.msra.mxu0 0
    %1037 = vmatprep.subr.bf16.mxu0 0
    %1038 = vmatpush2.bf16.msra.mxu0 0
    %1039 = vmatprep.subr.bf16.mxu0 0
    %1040 = vmatpush2.bf16.msra.mxu0 0
    %1041 = vmatprep.subr.bf16.mxu0 0
    %1042 = vmatpush2.bf16.msra.mxu0 0
    %1043 = vmatprep.mubr.bf16.mxu0 0
    %1044 = vmatmul.mubr.bf16.gmra.mxu0 %v1009
    %v1045 = vpop.f32.mrf.mxu0
    %v1046 = vadd.f32 0.0, %v1045
    %v1047 = vpop.f32.mrf.mxu0
    %v1048 = vpop.f32.mrf.mxu0
    %v1049 = vadd.f32 0.0, %v1048
    %v1050 = vpop.f32.mrf.mxu0
    %1051 = vdwg.mxu0
    %1052 = vset.pattern.permute.xlu0 2
    %1053 = vperm.xlu0 %1052, %v864
    %v1054 = vpop.permute.xlu0 %1053
    %1056 = vset.pattern.permute.xlu0 2
    %1057 = vperm.xlu0 %1056, %v867
    %v1058 = vpop.permute.xlu0 %1057
    %v1060 = vlaneseq
    %v1061 = vshrl.u32 %v1060, 7
    %v1062 = vsub.s32 2, %v1061
    %v1063 = vrot.slane %v894, %v1062
    %v1064 = vadd.f32 %v1054, %v1063
    %v1065 = vadd.f32 %v1058, %v1063
    %vm1066 = vcmp.ge.f32.partialorder %v1064, 0.0
    %vm1067 = vcmp.ge.f32.partialorder %v1065, 0.0
    %v1068 = vmul.f32 %v1064, 0.2
    %v1069 = vmul.f32 %v1065, 0.2
    %v1070 = vsel %vm1066, %v1064, %v1068
    %v1071 = vsel %vm1067, %v1065, %v1069
    %v1072 = vadd.f32 %v1070, %v47
    %v1073 = vadd.f32 %v1071, %v48
    %v1074 = vsel %vm311, %v1072, -inf
    %1075 = vmax.xlane.f32.xlu0 %v1074
    %v1076 = vpop.xlane.xlu0 %1075
    %v1077 = vsel %vm311, %v1073, -inf
    %1078 = vmax.xlane.f32.xlu0 %v1077
    %v1079 = vpop.xlane.xlu0 %1078
    %v1080 = vsub.f32 %v1072, %v1076
    %v1081 = vsub.f32 %v1073, %v1079
    %v1082 = vmul.f32 %v1080, 1.442695
    %v1083 = vpow.pop %v1082
    %v1084 = vmul.f32 %v1081, 1.442695
    %v1085 = vpow.pop %v1084
    %v1086 = vsel %vm311, %v1083, 0.0
    %1087 = vadd.xlane.f32.xlu0 %v1086
    %v1088 = vpop.xlane.xlu0 %1087
    %v1089 = vsel %vm311, %v1085, 0.0
    %1090 = vadd.xlane.f32.xlu0 %v1089
    %v1091 = vpop.xlane.xlu0 %1090
    %v1092 = vmax.f32 %v1088, 1e-20
    %v1093 = vmax.f32 %v1091, 1e-20
    %v1094 = vrcp.pop %v1092
    %v1095 = vrcp.pop %v1093
    %v1096 = vmul.f32 %v1083, %v1094
    %v1097 = vmul.f32 %v1085, %v1095
    %v1098 = vpack.c.bf16 %v1097, %v1096
    %1099 = vrot.lane.b32.xlu0 %v801, 96
    %v1100 = vpop.permute.xlu0 %1099
    %v1103 = vsel %vm311, %v1098, 0
    %1105 = vmatprep.subr.bf16.mxu0 0
    %1106 = vmatpush1.bf16.msra.mxu0 0
    %1107 = vmatprep.subr.bf16.mxu0 0
    %1108 = vmatpush1.bf16.msra.mxu0 0
    %1109 = vmatprep.subr.bf16.mxu0 0
    %1110 = vmatpush1.bf16.msra.mxu0 0
    %1111 = vmatprep.subr.bf16.mxu0 0
    %1112 = vmatpush1.bf16.msra.mxu0 0
    %1113 = vmatprep.subr.bf16.mxu0 0
    %1114 = vmatpush1.bf16.msra.mxu0 0
    %1115 = vmatprep.subr.bf16.mxu0 0
    %1116 = vmatpush1.bf16.msra.mxu0 0
    %1117 = vmatprep.subr.bf16.mxu0 0
    %1118 = vmatpush1.bf16.msra.mxu0 0
    %1119 = vmatprep.subr.bf16.mxu0 0
    %1120 = vmatpush1.bf16.msra.mxu0 %v1100
    %1121 = vmatprep.subr.bf16.mxu0 0
    %1122 = vmatpush2.bf16.msra.mxu0 0
    %1123 = vmatprep.subr.bf16.mxu0 0
    %1124 = vmatpush2.bf16.msra.mxu0 0
    %1125 = vmatprep.subr.bf16.mxu0 0
    %1126 = vmatpush2.bf16.msra.mxu0 0
    %1127 = vmatprep.subr.bf16.mxu0 0
    %1128 = vmatpush2.bf16.msra.mxu0 0
    %1129 = vmatprep.subr.bf16.mxu0 0
    %1130 = vmatpush2.bf16.msra.mxu0 0
    %1131 = vmatprep.subr.bf16.mxu0 0
    %1132 = vmatpush2.bf16.msra.mxu0 0
    %1133 = vmatprep.subr.bf16.mxu0 0
    %1134 = vmatpush2.bf16.msra.mxu0 0
    %1135 = vmatprep.subr.bf16.mxu0 0
    %1136 = vmatpush2.bf16.msra.mxu0 0
    %1137 = vmatprep.mubr.bf16.mxu0 0
    %1138 = vmatmul.mubr.bf16.gmra.mxu0 %v1103
    %v1139 = vpop.f32.mrf.mxu0
    %v1140 = vadd.f32 0.0, %v1139
    %v1141 = vpop.f32.mrf.mxu0
    %v1142 = vpop.f32.mrf.mxu0
    %v1143 = vadd.f32 0.0, %v1142
    %v1144 = vpop.f32.mrf.mxu0
    %1145 = vdwg.mxu0
    %1146 = vset.pattern.permute.xlu0 3
    %1147 = vperm.xlu0 %1146, %v864
    %v1148 = vpop.permute.xlu0 %1147
    %1150 = vset.pattern.permute.xlu0 3
    %1151 = vperm.xlu0 %1150, %v867
    %v1152 = vpop.permute.xlu0 %1151
    %v1154 = vlaneseq
    %v1155 = vshrl.u32 %v1154, 7
    %v1156 = vsub.s32 3, %v1155
    %v1157 = vrot.slane %v894, %v1156
    %v1158 = vadd.f32 %v1148, %v1157
    %v1159 = vadd.f32 %v1152, %v1157
    %vm1160 = vcmp.ge.f32.partialorder %v1158, 0.0
    %vm1161 = vcmp.ge.f32.partialorder %v1159, 0.0
    %v1162 = vmul.f32 %v1158, 0.2
    %v1163 = vmul.f32 %v1159, 0.2
    %v1164 = vsel %vm1160, %v1158, %v1162
    %v1165 = vsel %vm1161, %v1159, %v1163
    %v1166 = vadd.f32 %v1164, %v47
    %v1167 = vadd.f32 %v1165, %v48
    %v1168 = vsel %vm311, %v1166, -inf
    %1169 = vmax.xlane.f32.xlu0 %v1168
    %v1170 = vpop.xlane.xlu0 %1169
    %v1171 = vsel %vm311, %v1167, -inf
    %1172 = vmax.xlane.f32.xlu0 %v1171
    %v1173 = vpop.xlane.xlu0 %1172
    %v1174 = vsub.f32 %v1166, %v1170
    %v1175 = vsub.f32 %v1167, %v1173
    %v1176 = vmul.f32 %v1174, 1.442695
    %v1177 = vpow.pop %v1176
    %v1178 = vmul.f32 %v1175, 1.442695
    %v1179 = vpow.pop %v1178
    %v1180 = vsel %vm311, %v1177, 0.0
    %1181 = vadd.xlane.f32.xlu0 %v1180
    %v1182 = vpop.xlane.xlu0 %1181
    %v1183 = vsel %vm311, %v1179, 0.0
    %1184 = vadd.xlane.f32.xlu0 %v1183
    %v1185 = vpop.xlane.xlu0 %1184
    %v1186 = vmax.f32 %v1182, 1e-20
    %v1187 = vmax.f32 %v1185, 1e-20
    %v1188 = vrcp.pop %v1186
    %v1189 = vrcp.pop %v1187
    %v1190 = vmul.f32 %v1177, %v1188
    %v1191 = vmul.f32 %v1179, %v1189
    %v1192 = vpack.c.bf16 %v1191, %v1190
    %1193 = vrot.lane.b32.xlu0 %v801, 80
    %v1194 = vpop.permute.xlu0 %1193
    %v1197 = vsel %vm311, %v1192, 0
    %1199 = vmatprep.subr.bf16.mxu0 0
    %1200 = vmatpush1.bf16.msra.mxu0 0
    %1201 = vmatprep.subr.bf16.mxu0 0
    %1202 = vmatpush1.bf16.msra.mxu0 0
    %1203 = vmatprep.subr.bf16.mxu0 0
    %1204 = vmatpush1.bf16.msra.mxu0 0
    %1205 = vmatprep.subr.bf16.mxu0 0
    %1206 = vmatpush1.bf16.msra.mxu0 0
    %1207 = vmatprep.subr.bf16.mxu0 0
    %1208 = vmatpush1.bf16.msra.mxu0 0
    %1209 = vmatprep.subr.bf16.mxu0 0
    %1210 = vmatpush1.bf16.msra.mxu0 0
    %1211 = vmatprep.subr.bf16.mxu0 0
    %1212 = vmatpush1.bf16.msra.mxu0 0
    %1213 = vmatprep.subr.bf16.mxu0 0
    %1214 = vmatpush1.bf16.msra.mxu0 %v1194
    %1215 = vmatprep.subr.bf16.mxu0 0
    %1216 = vmatpush2.bf16.msra.mxu0 0
    %1217 = vmatprep.subr.bf16.mxu0 0
    %1218 = vmatpush2.bf16.msra.mxu0 0
    %1219 = vmatprep.subr.bf16.mxu0 0
    %1220 = vmatpush2.bf16.msra.mxu0 0
    %1221 = vmatprep.subr.bf16.mxu0 0
    %1222 = vmatpush2.bf16.msra.mxu0 0
    %1223 = vmatprep.subr.bf16.mxu0 0
    %1224 = vmatpush2.bf16.msra.mxu0 0
    %1225 = vmatprep.subr.bf16.mxu0 0
    %1226 = vmatpush2.bf16.msra.mxu0 0
    %1227 = vmatprep.subr.bf16.mxu0 0
    %1228 = vmatpush2.bf16.msra.mxu0 0
    %1229 = vmatprep.subr.bf16.mxu0 0
    %1230 = vmatpush2.bf16.msra.mxu0 0
    %1231 = vmatprep.mubr.bf16.mxu0 0
    %1232 = vmatmul.mubr.bf16.gmra.mxu0 %v1197
    %v1233 = vpop.f32.mrf.mxu0
    %v1234 = vadd.f32 0.0, %v1233
    %v1235 = vpop.f32.mrf.mxu0
    %v1236 = vpop.f32.mrf.mxu0
    %v1237 = vadd.f32 0.0, %v1236
    %v1238 = vpop.f32.mrf.mxu0
    %1239 = vdwg.mxu0
    %v1241 = vsel %vm311, %v956, 0
    %1243 = vmatprep.subr.bf16.mxu0 0
    %1244 = vmatpush1.bf16.msra.mxu0 0
    %1245 = vmatprep.subr.bf16.mxu0 0
    %1246 = vmatpush1.bf16.msra.mxu0 0
    %1247 = vmatprep.subr.bf16.mxu0 0
    %1248 = vmatpush1.bf16.msra.mxu0 0
    %1249 = vmatprep.subr.bf16.mxu0 0
    %1250 = vmatpush1.bf16.msra.mxu0 0
    %1251 = vmatprep.subr.bf16.mxu0 0
    %1252 = vmatpush1.bf16.msra.mxu0 0
    %1253 = vmatprep.subr.bf16.mxu0 0
    %1254 = vmatpush1.bf16.msra.mxu0 0
    %1255 = vmatprep.subr.bf16.mxu0 0
    %1256 = vmatpush1.bf16.msra.mxu0 0
    %1257 = vmatprep.subr.bf16.mxu0 0
    %1258 = vmatpush1.bf16.msra.mxu0 %v801
    %1259 = vmatprep.subr.bf16.mxu0 0
    %1260 = vmatpush2.bf16.msra.mxu0 0
    %1261 = vmatprep.subr.bf16.mxu0 0
    %1262 = vmatpush2.bf16.msra.mxu0 0
    %1263 = vmatprep.subr.bf16.mxu0 0
    %1264 = vmatpush2.bf16.msra.mxu0 0
    %1265 = vmatprep.subr.bf16.mxu0 0
    %1266 = vmatpush2.bf16.msra.mxu0 0
    %1267 = vmatprep.subr.bf16.mxu0 0
    %1268 = vmatpush2.bf16.msra.mxu0 0
    %1269 = vmatprep.subr.bf16.mxu0 0
    %1270 = vmatpush2.bf16.msra.mxu0 0
    %1271 = vmatprep.subr.bf16.mxu0 0
    %1272 = vmatpush2.bf16.msra.mxu0 0
    %1273 = vmatprep.subr.bf16.mxu0 0
    %1274 = vmatpush2.bf16.msra.mxu0 0
    %1275 = vmatprep.mubr.bf16.mxu0 0
    %1276 = vmatmul.mubr.bf16.gmra.mxu0 %v1241
    %v1277 = vpop.f32.mrf.mxu0
    %v1278 = vadd.f32 %v1046, %v1277
    %v1279 = vpop.f32.mrf.mxu0
    %v1280 = vpop.f32.mrf.mxu0
    %v1281 = vadd.f32 %v1049, %v1280
    %v1282 = vpop.f32.mrf.mxu0
    %1283 = vdwg.mxu0
    %v1284 = vadd.f32 %v1278, %v1140
    %v1285 = vadd.f32 %v1281, %v1143
    %v1286 = vadd.f32 %v1284, %v1234
    %v1287 = vadd.f32 %v1285, %v1237
    %1290 = vrot.lane.b32.xlu0 %v713, 112
    %v1291 = vpop.permute.xlu0 %1290
    %1292 = vrot.lane.b32.xlu0 %v714, 112
    %v1293 = vpop.permute.xlu0 %1292
    %v1296 = vadd.f32 %v713, %v1291
    %v1297 = vadd.f32 %v714, %v1293
    %1299 = vrot.lane.b32.xlu0 %v731, 112
    %v1300 = vpop.permute.xlu0 %1299
    %v1302 = vadd.f32 %v731, %v1300
    %1303 = vrot.lane.b32.xlu0 %v713, 96
    %v1304 = vpop.permute.xlu0 %1303
    %1305 = vrot.lane.b32.xlu0 %v714, 96
    %v1306 = vpop.permute.xlu0 %1305
    %v1309 = vadd.f32 %v1296, %v1304
    %v1310 = vadd.f32 %v1297, %v1306
    %1311 = vrot.lane.b32.xlu0 %v731, 96
    %v1312 = vpop.permute.xlu0 %1311
    %v1314 = vadd.f32 %v1302, %v1312
    %1315 = vrot.lane.b32.xlu0 %v713, 80
    %v1316 = vpop.permute.xlu0 %1315
    %1317 = vrot.lane.b32.xlu0 %v714, 80
    %v1318 = vpop.permute.xlu0 %1317
    %v1321 = vadd.f32 %v1309, %v1316
    %v1322 = vadd.f32 %v1310, %v1318
    %1323 = vrot.lane.b32.xlu0 %v731, 80
    %v1324 = vpop.permute.xlu0 %1323
    %v1326 = vadd.f32 %v1314, %v1324
    %v1327 = vadd.f32 %v1286, %v1321
    %v1328 = vadd.f32 %v1287, %v1322
    %v1330 = vlaneseq
    %v1331 = vshrl.u32 %v1330, 7
    %v1332 = vsub.s32 0, %v1331
    %v1333 = vrot.slane %v1326, %v1332
    %v1335 = vadd.f32 %v1327, %v1333
    %v1336 = vadd.f32 %v1328, %v1333
    %v1337 = vmul.f32 %v1335, 0.25
    %v1338 = vmul.f32 %v1336, 0.25
    %v1339 = vld [vmem:[%s2] sm:$0xff]
    %v1340 = vld [vmem:[%s2 + $0x8] sm:$0xff]
    %v1341 = vld [vmem:[%s10] sm:$0x1]
    %v1343 = vlaneseq
    %v1344 = vshrl.u32 %v1343, 7
    %v1345 = vsub.s32 0, %v1344
    %v1346 = vrot.slane %v1341, %v1345
    %v1348 = vmul.f32 %v1337, %v1346
    %v1349 = vmul.f32 %v1338, %v1346
    %v1350 = vsel %vm311, %v1348, 0.0
    %1351 = vadd.xlane.f32.xlu0 %v1350
    %v1352 = vpop.xlane.xlu0 %1351
    %v1353 = vsel %vm311, %v1349, 0.0
    %1354 = vadd.xlane.f32.xlu0 %v1353
    %v1355 = vpop.xlane.xlu0 %1354
    %v1356 = vld [vmem:[#allocation2] sm:$0x1]
    %v1358 = vlaneseq
    %v1359 = vshrl.u32 %v1358, 7
    %v1360 = vsub.s32 0, %v1359
    %v1361 = vrot.slane %v1356, %v1360
    %v1363 = vadd.f32 %v1352, %v1361
    %v1364 = vadd.f32 %v1355, %v1361
    %v1365 = vxor.u32 %v1363, 2147483648
    %v1366 = vxor.u32 %v1364, 2147483648
    %v1367 = vmul.f32 %v1365, 1.442695
    %v1368 = vpow.pop %v1367
    %v1369 = vmul.f32 %v1366, 1.442695
    %v1370 = vpow.pop %v1369
    %v1371 = vadd.f32 %v1368, 1.0
    %v1372 = vadd.f32 %v1370, 1.0
    %v1373 = vrcp.pop %v1371
    %v1374 = vmul.f32 1.0, %v1373
    %v1375 = vrcp.pop %v1372
    %v1376 = vmul.f32 1.0, %v1375
    %1378 = vset.pattern.permute.xlu0 0
    %1379 = vperm.xlu0 %1378, %v1374
    %v1380 = vpop.permute.xlu0 %1379
    %1383 = vset.pattern.permute.xlu0 0
    %1384 = vperm.xlu0 %1383, %v1376
    %v1385 = vpop.permute.xlu0 %1384
    %v1387 = vmul.f32 %v1337, %v1380
    %v1388 = vmul.f32 %v1338, %v1385
    %v1389 = vpack.c.bf16 %v1388, %v1387
    %v1390 = vpack.c.bf16 %v1340, %v1339
    %1391 = vxpose.xlu0.c.b16.start [1/8] %v1390, 128
    %1392 = vxpose.xlu0.c.b16.cont [2/8] 0, 128
    %1393 = vxpose.xlu0.c.b16.cont [3/8] 0, 128
    %1394 = vxpose.xlu0.c.b16.cont [4/8] 0, 128
    %1395 = vxpose.xlu0.c.b16.cont [5/8] 0, 128
    %1396 = vxpose.xlu0.c.b16.cont [6/8] 0, 128
    %1397 = vxpose.xlu0.c.b16.cont [7/8] 0, 128
    %1398 = vxpose.xlu0.c.b16.end [8/8] 0, 128
    %v1399 = vpop.trf.xlu0
    %v1400 = vpop.trf.xlu0
    %v1401 = vpop.trf.xlu0
    %v1402 = vpop.trf.xlu0
    %v1403 = vpop.trf.xlu0
    %v1404 = vpop.trf.xlu0
    %v1405 = vpop.trf.xlu0
    %v1406 = vpop.trf.xlu0
    %v1408 = vsel %vm311, %v1399, 0
    %1410 = vmatprep.subr.bf16.mxu0 0
    %1411 = vmatpush1.bf16.msra.mxu0 0
    %1412 = vmatprep.subr.bf16.mxu0 0
    %1413 = vmatpush1.bf16.msra.mxu0 0
    %1414 = vmatprep.subr.bf16.mxu0 0
    %1415 = vmatpush1.bf16.msra.mxu0 0
    %1416 = vmatprep.subr.bf16.mxu0 0
    %1417 = vmatpush1.bf16.msra.mxu0 0
    %1418 = vmatprep.subr.bf16.mxu0 0
    %1419 = vmatpush1.bf16.msra.mxu0 0
    %1420 = vmatprep.subr.bf16.mxu0 0
    %1421 = vmatpush1.bf16.msra.mxu0 0
    %1422 = vmatprep.subr.bf16.mxu0 0
    %1423 = vmatpush1.bf16.msra.mxu0 0
    %1424 = vmatprep.subr.bf16.mxu0 0
    %1425 = vmatpush1.bf16.msra.mxu0 %v1389
    %1426 = vmatprep.subr.bf16.mxu0 0
    %1427 = vmatpush2.bf16.msra.mxu0 0
    %1428 = vmatprep.subr.bf16.mxu0 0
    %1429 = vmatpush2.bf16.msra.mxu0 0
    %1430 = vmatprep.subr.bf16.mxu0 0
    %1431 = vmatpush2.bf16.msra.mxu0 0
    %1432 = vmatprep.subr.bf16.mxu0 0
    %1433 = vmatpush2.bf16.msra.mxu0 0
    %1434 = vmatprep.subr.bf16.mxu0 0
    %1435 = vmatpush2.bf16.msra.mxu0 0
    %1436 = vmatprep.subr.bf16.mxu0 0
    %1437 = vmatpush2.bf16.msra.mxu0 0
    %1438 = vmatprep.subr.bf16.mxu0 0
    %1439 = vmatpush2.bf16.msra.mxu0 0
    %1440 = vmatprep.subr.bf16.mxu0 0
    %1441 = vmatpush2.bf16.msra.mxu0 0
    %1442 = vmatprep.mubr.bf16.mxu0 0
    %1443 = vmatmul.mubr.bf16.gmra.mxu0 %v1408
    %v1444 = vpop.f32.mrf.mxu0
    %v1445 = vadd.f32 0.0, %v1444
    %v1446 = vpop.f32.mrf.mxu0
    %v1447 = vpop.f32.mrf.mxu0
    %v1448 = vpop.f32.mrf.mxu0
    %1449 = vdwg.mxu0
    %vm1450 = vcmp.gt.f32.partialorder %v1339, 0.0
    %vm1451 = vcmp.gt.f32.partialorder %v1340, 0.0
    %v1452 = vsel %vm1450, 1, 0
    %v1453 = vsel %vm1451, 1, 0
    %1454 = vset.pattern.permute.xlu0 0
    %1455 = vperm.xlu0 %1454, %v1452
    %v1456 = vpop.permute.xlu0 %1455
    %1457 = vset.pattern.permute.xlu0 0
    %1458 = vperm.xlu0 %1457, %v1453
    %v1459 = vpop.permute.xlu0 %1458
    %vm1460 = vcmp.eq.s32.totalorder %v1456, 1
    %vm1461 = vcmp.eq.s32.totalorder %v1459, 1
    %v1462 = vsel %vm1460, %v1337, -1e+30
    %v1463 = vsel %vm1461, %v1338, -1e+30
    %v1464 = vsel %vm311, %v1462, -inf
    %v1465 = vsel %vm311, %v1463, -inf
    %v1466 = vmax.f32 %v1464, %v1465
    %v1467 = vrot.slane %v1466, 4
    %v1468 = vmax.f32 %v1466, %v1467
    %v1469 = vrot.slane %v1468, 2
    %v1470 = vmax.f32 %v1468, %v1469
    %v1471 = vrot.slane %v1470, 1
    %v1472 = vmax.f32 %v1470, %v1471
    %1473 = vset.pattern.permute.xlu0 1
    %1474 = vperm.xlu0 %1473, %v1452
    %v1475 = vpop.permute.xlu0 %1474
    %1476 = vset.pattern.permute.xlu0 1
    %1477 = vperm.xlu0 %1476, %v1453
    %v1478 = vpop.permute.xlu0 %1477
    %vm1479 = vcmp.eq.s32.totalorder %v1475, 1
    %vm1480 = vcmp.eq.s32.totalorder %v1478, 1
    %v1481 = vsel %vm1479, %v1337, -1e+30
    %v1482 = vsel %vm1480, %v1338, -1e+30
    %v1483 = vsel %vm311, %v1481, -inf
    %v1484 = vsel %vm311, %v1482, -inf
    %v1485 = vmax.f32 %v1483, %v1484
    %v1486 = vrot.slane %v1485, 4
    %v1487 = vmax.f32 %v1485, %v1486
    %v1488 = vrot.slane %v1487, 2
    %v1489 = vmax.f32 %v1487, %v1488
    %v1490 = vrot.slane %v1489, 1
    %v1491 = vmax.f32 %v1489, %v1490
    %vm1492 = vcmask 1040384
    %v1493 = vsel %vm1492, %v1472, %v1491
    %1495 = vrot.lane.b32.xlu0 %v1493, 16
    %v1496 = vpop.permute.xlu0 %1495
    %v1498 = vsel %vm311, %v1445, %v1496
    %vm1499 = vcmask 254976
    %1500 = vst.msk [vmem:[#allocation3] sm:$0x3] %vm1499, %v1498
    // Predicated region
    $region50: #{tpu_custom_call.1} parent=1 // pred_check
      _
    $region51: #{tpu_custom_call.1} parent=1 // pred_check_branch
      %1502 = sbr.rel (0) target = $region53
    $region52: #{tpu_custom_call.1} parent=1 // pred_region
      %s1504 = ssub.s32 32, 32
      %1505 = vsyncadd [#allocation4], %s1504
      %s1507 = sshll.u32 [#allocation3], 4
      %s1508 = int_to_ptr.vmem [resolvable:$true] %s1507
      %1510 = dma.vmem_to_hbm [thread:$0]  %s1508, 32, %s12, [#allocation4]
    $region53: #{tpu_custom_call.1} parent=1 // pred_fallthru
      _
    // Predicated region
    $region54: #{tpu_custom_call.1} parent=1 // pred_check
      _
    $region55: #{tpu_custom_call.1} parent=1 // pred_check_branch
      %1512 = sbr.rel (0) target = $region57
    $region56: #{tpu_custom_call.1} parent=1 // pred_region
      %1513 = dma.done [#allocation4], 32
    $region57: #{tpu_custom_call.1} parent=1 // pred_fallthru
      _
    %1514 = vsyncpa [#allocation4], 1

</llo_original>
